<compile_context>
chip_gen: v5e
topology: v5e:2x2
jax: 0.10.0
libtpu: 0.0.40
codegen_flags: <defaults>
</compile_context>

<pallas_src>
import functools
import math

import jax
import jax.numpy as jnp
from jax.experimental import pallas as pl
from jax.experimental.pallas import tpu as pltpu

EPS = 1e-5  # nn.LayerNorm default


# ---------------------------------------------------------------------------
# VMEM budgeting
# ---------------------------------------------------------------------------
def _vmem_limit_bytes():
    """Scoped-VMEM limit derived from the chip (~55% of capacity, capped)."""
    cap = 64 * 1024 * 1024  # conservative fallback (v7x per-core VMEM)
    try:
        info = pltpu.get_tpu_info()
        cap = int(getattr(info, "vmem_capacity_bytes", cap))
    except Exception:
        pass
    limit = int(cap * 0.55)
    return max(24 * 1024 * 1024, min(limit, 96 * 1024 * 1024))


def _choose_tile_rows(rows, hidden, ffn_hidden, io_itemsize, budget_bytes):
    """Largest row tile whose real VMEM footprint fits the budget."""
    # Row-independent footprint: all per-modality weights/biases (double-
    # buffered by the pipeline) plus their in-kernel bf16 casts.
    weight_elems = 2 * hidden * hidden + 2 * hidden * ffn_hidden + 8 * hidden
    fixed_bytes = weight_elems * (4 * 2 + 2)
    # Per-row footprint: q / v / out blocks (double-buffered, I/O dtype), the
    # f32 FFN hidden + its bf16 cast, and f32 activation temporaries.
    per_row_bytes = (3 * hidden * io_itemsize * 2
                     + ffn_hidden * (4 + 2)
                     + 8 * hidden * 4)
    avail = budget_bytes - fixed_bytes
    t = max(8, avail // per_row_bytes)
    t = min(int(t), 2048)
    t = max(8, (t // 8) * 8)
    return rows if rows <= t else t


# ---------------------------------------------------------------------------
# Fused kernel: cross-attn -> AddNorm -> self-attn -> FFN -> AddNorm
# (one grid step = one modality x one row tile; weights resident in VMEM)
# ---------------------------------------------------------------------------
def _bridge_block_kernel(q_ref, v_ref,
                         wvc_ref, bvc_ref, ga_ref, ba_ref,
                         wvs_ref, bvs_ref,
                         w1_ref, b1_ref, w2_ref, b2_ref,
                         gb_ref, bb_ref,
                         o_ref, *, inv_hidden):
    f32 = jnp.float32
    q = q_ref[...].astype(f32)   # queries / residual for this modality
    v = v_ref[...].astype(f32)   # cross-attention values (the other modality)

    def mm(x, w_ref):
        # bf16 operands + f32 accumulation: one native MXU pass per tile
        # (vs. the 6-pass f32 "highest" decomposition).
        return jnp.dot(x.astype(jnp.bfloat16), w_ref[...].astype(jnp.bfloat16),
                       preferred_element_type=f32)

    def layer_norm(z, g_ref, b_ref):
        # Two-pass (mean-centred) variance: no E[x^2]-E[x]^2 cancellation.
        mean = jnp.sum(z, axis=-1, keepdims=True) * inv_hidden
        zc = z - mean
        var = jnp.sum(zc * zc, axis=-1, keepdims=True) * inv_hidden
        return (zc * jax.lax.rsqrt(var + EPS) * g_ref[...].astype(f32)
                + b_ref[...].astype(f32))

    # 1) cross attention (exact value-path reduction of MultiHeadAttention)
    a = jnp.maximum(mm(v, wvc_ref) + bvc_ref[...].astype(f32), 0.0) + q
    # 2) AddNorm3 / AddNorm4
    x = layer_norm(q + a, ga_ref, ba_ref)
    # 3) self attention (same reduction; queries == keys == values == x)
    s = jnp.maximum(mm(x, wvs_ref) + bvs_ref[...].astype(f32), 0.0) + x
    # 4) FFN (hidden stays in VMEM; ReLU output cast to bf16 for the 2nd pass)
    h = jnp.maximum(mm(s, w1_ref) + b1_ref[...].astype(f32), 0.0)
    f = mm(h, w2_ref) + b2_ref[...].astype(f32)
    # 5) AddNorm5 / AddNorm6
    o_ref[...] = layer_norm(s + f, gb_ref, bb_ref).astype(o_ref.dtype)


# ---------------------------------------------------------------------------
# BridgeTowerBlock forward (single fused pallas_call)
# ---------------------------------------------------------------------------
@jax.jit
def bridge_tower_block(modality_1, modality_2, params):
    rows, hidden = modality_1.shape
    assert modality_2.shape == (rows, hidden)
    p = params
    ffn_hidden = p["ffn1"]["w1"].shape[1]
    assert p["ffn1"]["w2"].shape[1] == hidden, "FFN output must equal num_hiddens"

    def stack2(a, b):            # (d0, d1) weights -> (2, d0, d1)
        return jnp.stack([a, b])

    def row2(a, b):              # (d,) vectors -> (2, 1, d)
        s = jnp.stack([a, b])
        return s.reshape(2, 1, s.shape[-1])

    # modality 0 chain: queries = m1, cross-attn values = m2 (and vice versa)
    queries = jnp.stack([modality_1, modality_2])          # (2, rows, H)
    values = jnp.stack([modality_2, modality_1])           # (2, rows, H)

    wv_c = stack2(p["cross1"]["wv"], p["cross2"]["wv"])
    bv_c = row2(p["cross1"]["bv"], p["cross2"]["bv"])
    g_a = row2(p["ln3"]["gamma"], p["ln4"]["gamma"])
    b_a = row2(p["ln3"]["beta"], p["ln4"]["beta"])
    wv_s = stack2(p["self1"]["wv"], p["self2"]["wv"])
    bv_s = row2(p["self1"]["bv"], p["self2"]["bv"])
    w1 = stack2(p["ffn1"]["w1"], p["ffn2"]["w1"])
    b1 = row2(p["ffn1"]["b1"], p["ffn2"]["b1"])
    w2 = stack2(p["ffn1"]["w2"], p["ffn2"]["w2"])
    b2 = row2(p["ffn1"]["b2"], p["ffn2"]["b2"])
    g_b = row2(p["ln5"]["gamma"], p["ln6"]["gamma"])
    b_b = row2(p["ln5"]["beta"], p["ln6"]["beta"])

    io_itemsize = jnp.dtype(modality_1.dtype).itemsize
    vmem_limit = _vmem_limit_bytes()
    tile_rows = _choose_tile_rows(rows, hidden, ffn_hidden, io_itemsize,
                                  budget_bytes=int(vmem_limit * 0.6))
    grid = (2, pl.cdiv(rows, tile_rows))   # (modality, row tile); edge clipped

    act_spec = pl.BlockSpec((None, tile_rows, hidden), lambda m, r: (m, r, 0))

    def const_spec(d0, d1):      # per-modality constant (weights / biases / LN)
        return pl.BlockSpec((None, d0, d1), lambda m, r: (m, 0, 0))

    in_specs = [
        act_spec,                           # queries
        act_spec,                           # cross-attention values
        const_spec(hidden, hidden),         # cross Wv
        const_spec(1, hidden),              # cross bv
        const_spec(1, hidden),              # ln3/ln4 gamma
        const_spec(1, hidden),              # ln3/ln4 beta
        const_spec(hidden, hidden),         # self Wv
        const_spec(1, hidden),              # self bv
        const_spec(hidden, ffn_hidden),     # ffn w1
        const_spec(1, ffn_hidden),          # ffn b1
        const_spec(ffn_hidden, hidden),     # ffn w2
        const_spec(1, hidden),              # ffn b2
        const_spec(1, hidden),              # ln5/ln6 gamma
        const_spec(1, hidden),              # ln5/ln6 beta
    ]

    out = pl.pallas_call(
        functools.partial(_bridge_block_kernel, inv_hidden=1.0 / hidden),
        out_shape=jax.ShapeDtypeStruct((2, rows, hidden), modality_1.dtype),
        grid=grid,
        in_specs=in_specs,
        out_specs=act_spec,
        compiler_params=pltpu.CompilerParams(
            dimension_semantics=("parallel", "parallel"),
            vmem_limit_bytes=vmem_limit,
        ),
    )(queries, values, wv_c, bv_c, g_a, b_a, wv_s, bv_s,
      w1, b1, w2, b2, g_b, b_b)
    return out[0], out[1]


# ---------------------------------------------------------------------------
# Pure-JAX reference: literal translation of the PyTorch forward (incl. Q/K,
# head split, score, softmax).  Projection/FFN matmuls use the same bf16
# operands as the kernel; the head-internal matmuls use HIGHEST precision so
# the size-1 softmax weighted sum reproduces the f32 value projection exactly,
# as the torch f32 math does.
# ---------------------------------------------------------------------------
def _bf16_matmul(x, w):
    return jnp.dot(x.astype(jnp.bfloat16), w.astype(jnp.bfloat16),
                   preferred_element_type=jnp.float32)


def _layernorm_ref(z, gamma, beta):
    z = z.astype(jnp.float32)
    mean = jnp.mean(z, axis=-1, keepdims=True)
    zc = z - mean
    var = jnp.mean(zc * zc, axis=-1, keepdims=True)
    return zc * jax.lax.rsqrt(var + EPS) * gamma + beta


def _mha_ref(queries, keys, values, pp, num_heads):
    q = jax.nn.relu(_bf16_matmul(queries, pp["wq"]) + pp["bq"])
    k = jax.nn.relu(_bf16_matmul(keys, pp["wk"]) + pp["bk"])
    v = jax.nn.relu(_bf16_matmul(values, pp["wv"]) + pp["bv"])
    n, h = q.shape
    hd = h // num_heads

    def split(t):  # unsqueeze(1) + chunk(heads, dim=-1) + stack(dim=1)
        return jnp.transpose(t.reshape(n, 1, num_heads, hd), (0, 2, 1, 3))

    qs, ks, vs = split(q), split(k), split(v)
    score = jnp.matmul(qs, jnp.swapaxes(ks, -1, -2),
                       precision=jax.lax.Precision.HIGHEST) / math.sqrt(hd)
    score = jax.nn.softmax(score, axis=-1)
    a = jnp.matmul(score, vs, precision=jax.lax.Precision.HIGHEST)
    a = jnp.transpose(a, (0, 1, 3, 2)).reshape(n, h)    # permute + reshape
    return a + queries


def _ffn_ref(x, pp):
    h = jax.nn.relu(_bf16_matmul(x, pp["w1"]) + pp["b1"])
    return _bf16_matmul(h, pp["w2"]) + pp["b2"]


def bridge_tower_block_ref(m1, m2, params, num_heads):
    a1 = _mha_ref(m1, m2, m2, params["cross1"], num_heads)
    a2 = _mha_ref(m2, m2, m1, params["cross2"], num_heads)
    x1 = _layernorm_ref(m1 + a1, params["ln3"]["gamma"], params["ln3"]["beta"])
    x2 = _layernorm_ref(m2 + a2, params["ln4"]["gamma"], params["ln4"]["beta"])
    s1 = _mha_ref(x1, x1, x1, params["self1"], num_heads)
    s2 = _mha_ref(x2, x2, x2, params["self2"], num_heads)
    f1 = _ffn_ref(s1, params["ffn1"])
    f2 = _ffn_ref(s2, params["ffn2"])
    o1 = _layernorm_ref(s1 + f1, params["ln5"]["gamma"], params["ln5"]["beta"])
    o2 = _layernorm_ref(s2 + f2, params["ln6"]["gamma"], params["ln6"]["beta"])
    return o1, o2


if __name__ == "__main__":
    batch = 8
    num_hiddens = 256      # FFN default output is 256 -> residual requires num_hiddens == 256
    num_heads = 8
    ffn_hiddens = 1024

    key = jax.random.PRNGKey(0)
    keys = iter(jax.random.split(key, 32))

    def linear_init(k, d_in, d_out):
        kw, kb = jax.random.split(k)
        w = jax.random.normal(kw, (d_in, d_out), jnp.float32) / jnp.sqrt(float(d_in))
        b = 0.01 * jax.random.normal(kb, (d_out,), jnp.float32)
        return w, b

    def mha_params():
        wq, bq = linear_init(next(keys), num_hiddens, num_hiddens)
        wk, bk = linear_init(next(keys), num_hiddens, num_hiddens)
        wv, bv = linear_init(next(keys), num_hiddens, num_hiddens)
        return {"wq": wq, "bq": bq, "wk": wk, "bk": bk, "wv": wv, "bv": bv}

    def ffn_params():
        w1, b1 = linear_init(next(keys), num_hiddens, ffn_hiddens)
        w2, b2 = linear_init(next(keys), ffn_hiddens, num_hiddens)
        return {"w1": w1, "b1": b1, "w2": w2, "b2": b2}

    def ln_params():
        kg, kb = jax.random.split(next(keys))
        return {"gamma": 1.0 + 0.05 * jax.random.normal(kg, (num_hiddens,), jnp.float32),
                "beta": 0.05 * jax.random.normal(kb, (num_hiddens,), jnp.float32)}

    params = {
        "cross1": mha_params(), "cross2": mha_params(),
        "self1": mha_params(), "self2": mha_params(),
        "ffn1": ffn_params(), "ffn2": ffn_params(),
        "ln3": ln_params(), "ln4": ln_params(),
        "ln5": ln_params(), "ln6": ln_params(),
    }

    km1, km2 = jax.random.split(next(keys))
    modality_1 = jax.random.normal(km1, (batch, num_hiddens), jnp.float32)
    modality_2 = jax.random.normal(km2, (batch, num_hiddens), jnp.float32)

    out1, out2 = bridge_tower_block(modality_1, modality_2, params)
    out1, out2 = jax.block_until_ready((out1, out2))

    ref1, ref2 = bridge_tower_block_ref(modality_1, modality_2, params, num_heads)
    ref1, ref2 = jax.block_until_ready((ref1, ref2))

    assert out1.shape == (batch, num_hiddens) and out2.shape == (batch, num_hiddens)
    # Tolerance: kernel and reference run the same bf16-operand matmuls; the
    # only divergence source is an occasional adjacent-ulp bf16 rounding
    # between the Mosaic and XLA paths (typically <1e-5).  Structural bugs
    # would produce O(0.1+) errors.
    assert jnp.allclose(out1, ref1, atol=2e-3, rtol=2e-3), "output1 mismatch vs reference"
    assert jnp.allclose(out2, ref2, atol=2e-3, rtol=2e-3), "output2 mismatch vs reference"

    print("KERNEL_OK")
</pallas_src>

<mosaic_0001>
module attributes {stable_mosaic.version = 11 : i64} {
  func.func @_bridge_block_kernel(%arg0: i32, %arg1: i32, %arg2: memref<1x8x256xf32, #tpu.memory_space<vmem>>, %arg3: memref<1x8x256xf32, #tpu.memory_space<vmem>>, %arg4: memref<1x256x256xf32, #tpu.memory_space<vmem>>, %arg5: memref<1x1x256xf32, #tpu.memory_space<vmem>>, %arg6: memref<1x1x256xf32, #tpu.memory_space<vmem>>, %arg7: memref<1x1x256xf32, #tpu.memory_space<vmem>>, %arg8: memref<1x256x256xf32, #tpu.memory_space<vmem>>, %arg9: memref<1x1x256xf32, #tpu.memory_space<vmem>>, %arg10: memref<1x256x1024xf32, #tpu.memory_space<vmem>>, %arg11: memref<1x1x1024xf32, #tpu.memory_space<vmem>>, %arg12: memref<1x1024x256xf32, #tpu.memory_space<vmem>>, %arg13: memref<1x1x256xf32, #tpu.memory_space<vmem>>, %arg14: memref<1x1x256xf32, #tpu.memory_space<vmem>>, %arg15: memref<1x1x256xf32, #tpu.memory_space<vmem>>, %arg16: memref<1x8x256xf32, #tpu.memory_space<vmem>>) attributes {dimension_semantics = [#tpu.dimension_semantics<parallel>, #tpu.dimension_semantics<parallel>], iteration_bounds = array<i64: 2, 1>, scalar_prefetch = 0 : i64, scratch_operands = 0 : i64, tpu.core_type = #tpu.core_type<tc>, window_params = [{transform_indices = @transform_0, window_bounds = array<i64: 1, 8, 256>}, {transform_indices = @transform_1, window_bounds = array<i64: 1, 8, 256>}, {transform_indices = @transform_2, window_bounds = array<i64: 1, 256, 256>}, {transform_indices = @transform_3, window_bounds = array<i64: 1, 1, 256>}, {transform_indices = @transform_4, window_bounds = array<i64: 1, 1, 256>}, {transform_indices = @transform_5, window_bounds = array<i64: 1, 1, 256>}, {transform_indices = @transform_6, window_bounds = array<i64: 1, 256, 256>}, {transform_indices = @transform_7, window_bounds = array<i64: 1, 1, 256>}, {transform_indices = @transform_8, window_bounds = array<i64: 1, 256, 1024>}, {transform_indices = @transform_9, window_bounds = array<i64: 1, 1, 1024>}, {transform_indices = @transform_10, window_bounds = array<i64: 1, 1024, 256>}, {transform_indices = @transform_11, window_bounds = array<i64: 1, 1, 256>}, {transform_indices = @transform_12, window_bounds = array<i64: 1, 1, 256>}, {transform_indices = @transform_13, window_bounds = array<i64: 1, 1, 256>}, {transform_indices = @transform_14, window_bounds = array<i64: 1, 8, 256>}]} {
    %c0 = arith.constant 0 : index
    %c0_0 = arith.constant 0 : index
    %c0_1 = arith.constant 0 : index
    %0 = vector.load %arg2[%c0, %c0_0, %c0_1] : memref<1x8x256xf32, #tpu.memory_space<vmem>>, vector<1x8x256xf32>
    %1 = vector.shape_cast %0 : vector<1x8x256xf32> to vector<8x256xf32>
    %c0_2 = arith.constant 0 : index
    %c0_3 = arith.constant 0 : index
    %c0_4 = arith.constant 0 : index
    %2 = vector.load %arg3[%c0_2, %c0_3, %c0_4] : memref<1x8x256xf32, #tpu.memory_space<vmem>>, vector<1x8x256xf32>
    %3 = vector.shape_cast %2 : vector<1x8x256xf32> to vector<8x256xf32>
    %4 = arith.truncf %3 : vector<8x256xf32> to vector<8x256xbf16>
    %c0_5 = arith.constant 0 : index
    %c0_6 = arith.constant 0 : index
    %c0_7 = arith.constant 0 : index
    %5 = vector.load %arg4[%c0_5, %c0_6, %c0_7] : memref<1x256x256xf32, #tpu.memory_space<vmem>>, vector<1x256x256xf32>
    %6 = vector.shape_cast %5 : vector<1x256x256xf32> to vector<256x256xf32>
    %7 = arith.truncf %6 : vector<256x256xf32> to vector<256x256xbf16>
    %cst = arith.constant dense<0.000000e+00> : vector<8x256xf32>
    %8 = tpu.matmul %4, %7, %cst {dimension_numbers = #tpu.dot_dimension_numbers<[1], [0], [0], [1], [0, 0, 1, 1], [], []>} : vector<8x256xbf16>, vector<256x256xbf16>, vector<8x256xf32> -> vector<8x256xf32>
    %c0_8 = arith.constant 0 : index
    %c0_9 = arith.constant 0 : index
    %c0_10 = arith.constant 0 : index
    %9 = vector.load %arg5[%c0_8, %c0_9, %c0_10] : memref<1x1x256xf32, #tpu.memory_space<vmem>>, vector<1x1x256xf32>
    %10 = vector.shape_cast %9 : vector<1x1x256xf32> to vector<1x256xf32>
    %11 = vector.broadcast %10 : vector<1x256xf32> to vector<8x256xf32>
    %12 = arith.addf %8, %11 : vector<8x256xf32>
    %cst_11 = arith.constant 0.000000e+00 : f32
    %13 = vector.broadcast %cst_11 : f32 to vector<8x256xf32>
    %14 = arith.maximumf %12, %13 : vector<8x256xf32>
    %15 = arith.addf %14, %1 : vector<8x256xf32>
    %16 = arith.addf %1, %15 : vector<8x256xf32>
    %cst_12 = arith.constant dense<0.000000e+00> : vector<8xf32>
    %17 = vector.multi_reduction <add>, %16, %cst_12 [1] : vector<8x256xf32> to vector<8xf32>
    %18 = vector.shape_cast %17 : vector<8xf32> to vector<8x1xf32>
    %cst_13 = arith.constant 3.906250e-03 : f32
    %19 = vector.broadcast %cst_13 : f32 to vector<8x1xf32>
    %20 = arith.mulf %18, %19 : vector<8x1xf32>
    %21 = vector.broadcast %20 : vector<8x1xf32> to vector<8x256xf32>
    %22 = arith.subf %16, %21 : vector<8x256xf32>
    %23 = arith.mulf %22, %22 : vector<8x256xf32>
    %cst_14 = arith.constant dense<0.000000e+00> : vector<8xf32>
    %24 = vector.multi_reduction <add>, %23, %cst_14 [1] : vector<8x256xf32> to vector<8xf32>
    %25 = vector.shape_cast %24 : vector<8xf32> to vector<8x1xf32>
    %cst_15 = arith.constant 3.906250e-03 : f32
    %26 = vector.broadcast %cst_15 : f32 to vector<8x1xf32>
    %27 = arith.mulf %25, %26 : vector<8x1xf32>
    %cst_16 = arith.constant 9.99999974E-6 : f32
    %28 = vector.broadcast %cst_16 : f32 to vector<8x1xf32>
    %29 = arith.addf %27, %28 : vector<8x1xf32>
    %30 = math.rsqrt %29 : vector<8x1xf32>
    %31 = vector.broadcast %30 : vector<8x1xf32> to vector<8x256xf32>
    %32 = arith.mulf %22, %31 : vector<8x256xf32>
    %c0_17 = arith.constant 0 : index
    %c0_18 = arith.constant 0 : index
    %c0_19 = arith.constant 0 : index
    %33 = vector.load %arg6[%c0_17, %c0_18, %c0_19] : memref<1x1x256xf32, #tpu.memory_space<vmem>>, vector<1x1x256xf32>
    %34 = vector.shape_cast %33 : vector<1x1x256xf32> to vector<1x256xf32>
    %35 = vector.broadcast %34 : vector<1x256xf32> to vector<8x256xf32>
    %36 = arith.mulf %32, %35 : vector<8x256xf32>
    %c0_20 = arith.constant 0 : index
    %c0_21 = arith.constant 0 : index
    %c0_22 = arith.constant 0 : index
    %37 = vector.load %arg7[%c0_20, %c0_21, %c0_22] : memref<1x1x256xf32, #tpu.memory_space<vmem>>, vector<1x1x256xf32>
    %38 = vector.shape_cast %37 : vector<1x1x256xf32> to vector<1x256xf32>
    %39 = vector.broadcast %38 : vector<1x256xf32> to vector<8x256xf32>
    %40 = arith.addf %36, %39 : vector<8x256xf32>
    %41 = arith.truncf %40 : vector<8x256xf32> to vector<8x256xbf16>
    %c0_23 = arith.constant 0 : index
    %c0_24 = arith.constant 0 : index
    %c0_25 = arith.constant 0 : index
    %42 = vector.load %arg8[%c0_23, %c0_24, %c0_25] : memref<1x256x256xf32, #tpu.memory_space<vmem>>, vector<1x256x256xf32>
    %43 = vector.shape_cast %42 : vector<1x256x256xf32> to vector<256x256xf32>
    %44 = arith.truncf %43 : vector<256x256xf32> to vector<256x256xbf16>
    %cst_26 = arith.constant dense<0.000000e+00> : vector<8x256xf32>
    %45 = tpu.matmul %41, %44, %cst_26 {dimension_numbers = #tpu.dot_dimension_numbers<[1], [0], [0], [1], [0, 0, 1, 1], [], []>} : vector<8x256xbf16>, vector<256x256xbf16>, vector<8x256xf32> -> vector<8x256xf32>
    %c0_27 = arith.constant 0 : index
    %c0_28 = arith.constant 0 : index
    %c0_29 = arith.constant 0 : index
    %46 = vector.load %arg9[%c0_27, %c0_28, %c0_29] : memref<1x1x256xf32, #tpu.memory_space<vmem>>, vector<1x1x256xf32>
    %47 = vector.shape_cast %46 : vector<1x1x256xf32> to vector<1x256xf32>
    %48 = vector.broadcast %47 : vector<1x256xf32> to vector<8x256xf32>
    %49 = arith.addf %45, %48 : vector<8x256xf32>
    %cst_30 = arith.constant 0.000000e+00 : f32
    %50 = vector.broadcast %cst_30 : f32 to vector<8x256xf32>
    %51 = arith.maximumf %49, %50 : vector<8x256xf32>
    %52 = arith.addf %51, %40 : vector<8x256xf32>
    %53 = arith.truncf %52 : vector<8x256xf32> to vector<8x256xbf16>
    %c0_31 = arith.constant 0 : index
    %c0_32 = arith.constant 0 : index
    %c0_33 = arith.constant 0 : index
    %54 = vector.load %arg10[%c0_31, %c0_32, %c0_33] : memref<1x256x1024xf32, #tpu.memory_space<vmem>>, vector<1x256x1024xf32>
    %55 = vector.shape_cast %54 : vector<1x256x1024xf32> to vector<256x1024xf32>
    %56 = arith.truncf %55 : vector<256x1024xf32> to vector<256x1024xbf16>
    %cst_34 = arith.constant dense<0.000000e+00> : vector<8x1024xf32>
    %57 = tpu.matmul %53, %56, %cst_34 {dimension_numbers = #tpu.dot_dimension_numbers<[1], [0], [0], [1], [0, 0, 1, 1], [], []>} : vector<8x256xbf16>, vector<256x1024xbf16>, vector<8x1024xf32> -> vector<8x1024xf32>
    %c0_35 = arith.constant 0 : index
    %c0_36 = arith.constant 0 : index
    %c0_37 = arith.constant 0 : index
    %58 = vector.load %arg11[%c0_35, %c0_36, %c0_37] : memref<1x1x1024xf32, #tpu.memory_space<vmem>>, vector<1x1x1024xf32>
    %59 = vector.shape_cast %58 : vector<1x1x1024xf32> to vector<1x1024xf32>
    %60 = vector.broadcast %59 : vector<1x1024xf32> to vector<8x1024xf32>
    %61 = arith.addf %57, %60 : vector<8x1024xf32>
    %cst_38 = arith.constant 0.000000e+00 : f32
    %62 = vector.broadcast %cst_38 : f32 to vector<8x1024xf32>
    %63 = arith.maximumf %61, %62 : vector<8x1024xf32>
    %64 = arith.truncf %63 : vector<8x1024xf32> to vector<8x1024xbf16>
    %c0_39 = arith.constant 0 : index
    %c0_40 = arith.constant 0 : index
    %c0_41 = arith.constant 0 : index
    %65 = vector.load %arg12[%c0_39, %c0_40, %c0_41] : memref<1x1024x256xf32, #tpu.memory_space<vmem>>, vector<1x1024x256xf32>
    %66 = vector.shape_cast %65 : vector<1x1024x256xf32> to vector<1024x256xf32>
    %67 = arith.truncf %66 : vector<1024x256xf32> to vector<1024x256xbf16>
    %cst_42 = arith.constant dense<0.000000e+00> : vector<8x256xf32>
    %68 = tpu.matmul %64, %67, %cst_42 {dimension_numbers = #tpu.dot_dimension_numbers<[1], [0], [0], [1], [0, 0, 1, 1], [], []>} : vector<8x1024xbf16>, vector<1024x256xbf16>, vector<8x256xf32> -> vector<8x256xf32>
    %c0_43 = arith.constant 0 : index
    %c0_44 = arith.constant 0 : index
    %c0_45 = arith.constant 0 : index
    %69 = vector.load %arg13[%c0_43, %c0_44, %c0_45] : memref<1x1x256xf32, #tpu.memory_space<vmem>>, vector<1x1x256xf32>
    %70 = vector.shape_cast %69 : vector<1x1x256xf32> to vector<1x256xf32>
    %71 = vector.broadcast %70 : vector<1x256xf32> to vector<8x256xf32>
    %72 = arith.addf %68, %71 : vector<8x256xf32>
    %73 = arith.addf %52, %72 : vector<8x256xf32>
    %cst_46 = arith.constant dense<0.000000e+00> : vector<8xf32>
    %74 = vector.multi_reduction <add>, %73, %cst_46 [1] : vector<8x256xf32> to vector<8xf32>
    %75 = vector.shape_cast %74 : vector<8xf32> to vector<8x1xf32>
    %cst_47 = arith.constant 3.906250e-03 : f32
    %76 = vector.broadcast %cst_47 : f32 to vector<8x1xf32>
    %77 = arith.mulf %75, %76 : vector<8x1xf32>
    %78 = vector.broadcast %77 : vector<8x1xf32> to vector<8x256xf32>
    %79 = arith.subf %73, %78 : vector<8x256xf32>
    %80 = arith.mulf %79, %79 : vector<8x256xf32>
    %cst_48 = arith.constant dense<0.000000e+00> : vector<8xf32>
    %81 = vector.multi_reduction <add>, %80, %cst_48 [1] : vector<8x256xf32> to vector<8xf32>
    %82 = vector.shape_cast %81 : vector<8xf32> to vector<8x1xf32>
    %cst_49 = arith.constant 3.906250e-03 : f32
    %83 = vector.broadcast %cst_49 : f32 to vector<8x1xf32>
    %84 = arith.mulf %82, %83 : vector<8x1xf32>
    %cst_50 = arith.constant 9.99999974E-6 : f32
    %85 = vector.broadcast %cst_50 : f32 to vector<8x1xf32>
    %86 = arith.addf %84, %85 : vector<8x1xf32>
    %87 = math.rsqrt %86 : vector<8x1xf32>
    %88 = vector.broadcast %87 : vector<8x1xf32> to vector<8x256xf32>
    %89 = arith.mulf %79, %88 : vector<8x256xf32>
    %c0_51 = arith.constant 0 : index
    %c0_52 = arith.constant 0 : index
    %c0_53 = arith.constant 0 : index
    %90 = vector.load %arg14[%c0_51, %c0_52, %c0_53] : memref<1x1x256xf32, #tpu.memory_space<vmem>>, vector<1x1x256xf32>
    %91 = vector.shape_cast %90 : vector<1x1x256xf32> to vector<1x256xf32>
    %92 = vector.broadcast %91 : vector<1x256xf32> to vector<8x256xf32>
    %93 = arith.mulf %89, %92 : vector<8x256xf32>
    %c0_54 = arith.constant 0 : index
    %c0_55 = arith.constant 0 : index
    %c0_56 = arith.constant 0 : index
    %94 = vector.load %arg15[%c0_54, %c0_55, %c0_56] : memref<1x1x256xf32, #tpu.memory_space<vmem>>, vector<1x1x256xf32>
    %95 = vector.shape_cast %94 : vector<1x1x256xf32> to vector<1x256xf32>
    %96 = vector.broadcast %95 : vector<1x256xf32> to vector<8x256xf32>
    %97 = arith.addf %93, %96 : vector<8x256xf32>
    %c0_57 = arith.constant 0 : index
    %c0_58 = arith.constant 0 : index
    %c0_59 = arith.constant 0 : index
    %98 = vector.load %arg16[%c0_57, %c0_58, %c0_59] : memref<1x8x256xf32, #tpu.memory_space<vmem>>, vector<1x8x256xf32>
    %99 = vector.shape_cast %98 : vector<1x8x256xf32> to vector<8x256xf32>
    %100 = vector.shape_cast %97 : vector<8x256xf32> to vector<1x8x256xf32>
    tpu.vector_store %arg16[%c0_57, %c0_58, %c0_59], %100 {strides = array<i32>} : memref<1x8x256xf32, #tpu.memory_space<vmem>>, vector<1x8x256xf32>,
    return
  }
  func.func @transform_0(%arg0: i32, %arg1: i32) -> (i32, i32, i32) {
    %c0_i32 = arith.constant 0 : i32
    %c0_i32_0 = arith.constant 0 : i32
    return %arg0, %arg1, %c0_i32 : i32, i32, i32
  }
  func.func @transform_1(%arg0: i32, %arg1: i32) -> (i32, i32, i32) {
    %c0_i32 = arith.constant 0 : i32
    %c0_i32_0 = arith.constant 0 : i32
    return %arg0, %arg1, %c0_i32 : i32, i32, i32
  }
  func.func @transform_2(%arg0: i32, %arg1: i32) -> (i32, i32, i32) {
    %c0_i32 = arith.constant 0 : i32
    %c0_i32_0 = arith.constant 0 : i32
    %c0_i32_1 = arith.constant 0 : i32
    return %arg0, %c0_i32, %c0_i32_0 : i32, i32, i32
  }
  func.func @transform_3(%arg0: i32, %arg1: i32) -> (i32, i32, i32) {
    %c0_i32 = arith.constant 0 : i32
    %c0_i32_0 = arith.constant 0 : i32
    %c0_i32_1 = arith.constant 0 : i32
    return %arg0, %c0_i32, %c0_i32_0 : i32, i32, i32
  }
  func.func @transform_4(%arg0: i32, %arg1: i32) -> (i32, i32, i32) {
    %c0_i32 = arith.constant 0 : i32
    %c0_i32_0 = arith.constant 0 : i32
    %c0_i32_1 = arith.constant 0 : i32
    return %arg0, %c0_i32, %c0_i32_0 : i32, i32, i32
  }
  func.func @transform_5(%arg0: i32, %arg1: i32) -> (i32, i32, i32) {
    %c0_i32 = arith.constant 0 : i32
    %c0_i32_0 = arith.constant 0 : i32
    %c0_i32_1 = arith.constant 0 : i32
    return %arg0, %c0_i32, %c0_i32_0 : i32, i32, i32
  }
  func.func @transform_6(%arg0: i32, %arg1: i32) -> (i32, i32, i32) {
    %c0_i32 = arith.constant 0 : i32
    %c0_i32_0 = arith.constant 0 : i32
    %c0_i32_1 = arith.constant 0 : i32
    return %arg0, %c0_i32, %c0_i32_0 : i32, i32, i32
  }
  func.func @transform_7(%arg0: i32, %arg1: i32) -> (i32, i32, i32) {
    %c0_i32 = arith.constant 0 : i32
    %c0_i32_0 = arith.constant 0 : i32
    %c0_i32_1 = arith.constant 0 : i32
    return %arg0, %c0_i32, %c0_i32_0 : i32, i32, i32
  }
  func.func @transform_8(%arg0: i32, %arg1: i32) -> (i32, i32, i32) {
    %c0_i32 = arith.constant 0 : i32
    %c0_i32_0 = arith.constant 0 : i32
    %c0_i32_1 = arith.constant 0 : i32
    return %arg0, %c0_i32, %c0_i32_0 : i32, i32, i32
  }
  func.func @transform_9(%arg0: i32, %arg1: i32) -> (i32, i32, i32) {
    %c0_i32 = arith.constant 0 : i32
    %c0_i32_0 = arith.constant 0 : i32
    %c0_i32_1 = arith.constant 0 : i32
    return %arg0, %c0_i32, %c0_i32_0 : i32, i32, i32
  }
  func.func @transform_10(%arg0: i32, %arg1: i32) -> (i32, i32, i32) {
    %c0_i32 = arith.constant 0 : i32
    %c0_i32_0 = arith.constant 0 : i32
    %c0_i32_1 = arith.constant 0 : i32
    return %arg0, %c0_i32, %c0_i32_0 : i32, i32, i32
  }
  func.func @transform_11(%arg0: i32, %arg1: i32) -> (i32, i32, i32) {
    %c0_i32 = arith.constant 0 : i32
    %c0_i32_0 = arith.constant 0 : i32
    %c0_i32_1 = arith.constant 0 : i32
    return %arg0, %c0_i32, %c0_i32_0 : i32, i32, i32
  }
  func.func @transform_12(%arg0: i32, %arg1: i32) -> (i32, i32, i32) {
    %c0_i32 = arith.constant 0 : i32
    %c0_i32_0 = arith.constant 0 : i32
    %c0_i32_1 = arith.constant 0 : i32
    return %arg0, %c0_i32, %c0_i32_0 : i32, i32, i32
  }
  func.func @transform_13(%arg0: i32, %arg1: i32) -> (i32, i32, i32) {
    %c0_i32 = arith.constant 0 : i32
    %c0_i32_0 = arith.constant 0 : i32
    %c0_i32_1 = arith.constant 0 : i32
    return %arg0, %c0_i32, %c0_i32_0 : i32, i32, i32
  }
  func.func @transform_14(%arg0: i32, %arg1: i32) -> (i32, i32, i32) {
    %c0_i32 = arith.constant 0 : i32
    %c0_i32_0 = arith.constant 0 : i32
    return %arg0, %arg1, %c0_i32 : i32, i32, i32
  }
}

</mosaic_0001>

<llo_original>
// kernel: bridge_tower_block.1
$region0: #{bridge_tower_block.1}
  #allocation0 [shape = 'u32[]', space=smem, size = 0x4, offset = 0x4, fixed_abs, tag = 'smem constant byte address 0x4 - core index']
  #allocation1 [shape = 'u32[72,128]{1,0:T(1,128)}', space=vmem, size = 0x9000, scoped, tag = 'internal scratch']
  %s0 = inlined_call_operand.vmem [shape: f32[2,8,256], index: 0, kind: input, shape index: {}]
  %s1 = inlined_call_operand.vmem [shape: f32[2,8,256], index: 1, kind: input, shape index: {}]
  %s2 = inlined_call_operand.vmem [shape: f32[2,256,256], index: 2, kind: input, shape index: {}]
  %s3 = inlined_call_operand.vmem [shape: f32[2,1,256], index: 3, kind: input, shape index: {}]
  %s4 = inlined_call_operand.vmem [shape: f32[2,1,256], index: 4, kind: input, shape index: {}]
  %s5 = inlined_call_operand.vmem [shape: f32[2,1,256], index: 5, kind: input, shape index: {}]
  %s6 = inlined_call_operand.vmem [shape: f32[2,256,256], index: 6, kind: input, shape index: {}]
  %s7 = inlined_call_operand.vmem [shape: f32[2,1,256], index: 7, kind: input, shape index: {}]
  %s8 = inlined_call_operand.vmem [shape: f32[2,256,1024], index: 8, kind: input, shape index: {}]
  %s9 = inlined_call_operand.vmem [shape: f32[2,1,1024], index: 9, kind: input, shape index: {}]
  %s10 = inlined_call_operand.vmem [shape: f32[2,1024,256], index: 10, kind: input, shape index: {}]
  %s11 = inlined_call_operand.vmem [shape: f32[2,1,256], index: 11, kind: input, shape index: {}]
  %s12 = inlined_call_operand.vmem [shape: f32[2,1,256], index: 12, kind: input, shape index: {}]
  %s13 = inlined_call_operand.vmem [shape: f32[2,1,256], index: 13, kind: input, shape index: {}]
  %s14 = inlined_call_operand.vmem [shape: f32[2,8,256], index: 14, kind: output, shape index: {}]
  %s15 = sld [smem:[#allocation0]]
  $region89: #{bridge_tower_block.1} parent=0
    _
  %s17 = ssub.s32 1, %s15
  %s18 = scalar_select 0, %s17, %s15
  loop: start=0, step=1, limit=4
  $region2: #{bridge_tower_block.1} parent=0 // loop_pre_header
    _
  $region3: #{bridge_tower_block.1} parent=0 // loop_header
    %s20 = sphi 0, %s24
    %p21 = scmp.ge.s32.totalorder %s20, 4
    %s27 = sphi 0, %s39
    %s28 = sphi 0, %s35
    %s29 = sphi 0, %s27
    %s30 = sphi 0, %s28
    %s31 = sphi 0, %s29
    %s32 = sphi 0, %s30
    %s44 = sphi 0, %s46
    %s47 = sphi 0, %s44
    %s48 = sphi 0, %s47
    %s64 = sphi 0, %s48
    %s72 = sphi 0, %s74
    %s75 = sphi 0, %s72
    %s76 = sphi 0, %s75
    %s92 = sphi 0, %s76
    %s98 = sphi 0, %s100
    %s101 = sphi 0, %s98
    %s102 = sphi 0, %s101
    %s118 = sphi 0, %s102
    %s124 = sphi 0, %s126
    %s127 = sphi 0, %s124
    %s128 = sphi 0, %s127
    %s144 = sphi 0, %s128
    %s150 = sphi 0, %s152
    %s153 = sphi 0, %s150
    %s154 = sphi 0, %s153
    %s170 = sphi 0, %s154
    %s176 = sphi 0, %s178
    %s179 = sphi 0, %s176
    %s180 = sphi 0, %s179
    %s196 = sphi 0, %s180
    %s202 = sphi 0, %s204
    %s205 = sphi 0, %s202
    %s206 = sphi 0, %s205
    %s222 = sphi 0, %s206
    %s228 = sphi 0, %s230
    %s231 = sphi 0, %s228
    %s232 = sphi 0, %s231
    %s248 = sphi 0, %s232
    %s254 = sphi 0, %s256
    %s257 = sphi 0, %s254
    %s258 = sphi 0, %s257
    %s274 = sphi 0, %s258
    %s280 = sphi 0, %s282
    %s283 = sphi 0, %s280
    %s284 = sphi 0, %s283
    %s300 = sphi 0, %s284
    %s306 = sphi 0, %s308
    %s309 = sphi 0, %s306
    %s310 = sphi 0, %s309
    %s326 = sphi 0, %s310
    %s332 = sphi 0, %s334
    %s335 = sphi 0, %s332
    %s336 = sphi 0, %s335
    %s352 = sphi 0, %s336
    %s358 = sphi 0, %s360
    %s361 = sphi 0, %s358
    %s362 = sphi 0, %s361
    %s378 = sphi 0, %s362
    %s384 = sphi 0, %s386
    %s387 = sphi 0, %s384
    %s388 = sphi 0, %s387
    %s404 = sphi 0, %s388
    %s412 = sphi 0, %s414
    %s415 = sphi 0, %s412
    %s416 = sphi 0, %s415
    %s432 = sphi 0, %s416
  $region4: #{bridge_tower_block.1} parent=0 // loop_header_branch
    %23 = sbr.rel (%p21) target = $region8
  $region5: #{bridge_tower_block.1} parent=0 // loop_body
    %s25 = ssub.s32 %s20, 1
    %s26 = ssub.s32 %s20, 2
    %s33 = sadd.s32 1, %s28
    %p34 = scmp.ge.s32.totalorder %s33, 1
    %s35 = scalar_select %p34, 0, %s33
    %s36 = sadd.s32 1, %s27
    %s37 = scalar_select %p34, %s36, %s27
    %p38 = scmp.ge.s32.totalorder %s37, 2
    %s39 = scalar_select %p38, 0, %s37
    %s40 = ssub.s32 %s27, %s39
    %s41 = ssub.s32 %s28, %s35
    %s42 = sor.u32 %s40, %s41
    %p43 = scmp.eq.s32.totalorder %s42, 0
    %s45 = sadd.s32 %s44, 1
    %s46 = scalar_select %p43, %s44, %s45
    %p49 = pneg %p43
    %p50 = scmp.eq.s32.totalorder %s20, 1
    %p51 = por %p49, %p50
    %p52 = scmp.ne.s32.totalorder %s44, %s47
    %p53 = scmp.eq.s32.totalorder %s20, 0
    %p54 = por %p52, %p53
    %p55 = scmp.ne.s32.totalorder %s44, %s47
    %p56 = scmp.eq.s32.totalorder %s25, 1
    %p57 = por %p55, %p56
    %p58 = scmp.ne.s32.totalorder %s47, %s48
    %p59 = scmp.eq.s32.totalorder %s25, 0
    %p60 = por %p58, %p59
    %p61 = scmp.ne.s32.totalorder %s47, %s48
    %p62 = scmp.eq.s32.totalorder %s26, 1
    %p63 = por %p61, %p62
    %p65 = scmp.ne.s32.totalorder %s48, %s64
    %p66 = scmp.eq.s32.totalorder %s26, 0
    %p67 = por %p65, %p66
    %s68 = ssub.s32 %s27, %s39
    %s69 = ssub.s32 %s28, %s35
    %s70 = sor.u32 %s68, %s69
    %p71 = scmp.eq.s32.totalorder %s70, 0
    %s73 = sadd.s32 %s72, 1
    %s74 = scalar_select %p71, %s72, %s73
    %p77 = pneg %p71
    %p78 = scmp.eq.s32.totalorder %s20, 1
    %p79 = por %p77, %p78
    %p80 = scmp.ne.s32.totalorder %s72, %s75
    %p81 = scmp.eq.s32.totalorder %s20, 0
    %p82 = por %p80, %p81
    %p83 = scmp.ne.s32.totalorder %s72, %s75
    %p84 = scmp.eq.s32.totalorder %s25, 1
    %p85 = por %p83, %p84
    %p86 = scmp.ne.s32.totalorder %s75, %s76
    %p87 = scmp.eq.s32.totalorder %s25, 0
    %p88 = por %p86, %p87
    %p89 = scmp.ne.s32.totalorder %s75, %s76
    %p90 = scmp.eq.s32.totalorder %s26, 1
    %p91 = por %p89, %p90
    %p93 = scmp.ne.s32.totalorder %s76, %s92
    %p94 = scmp.eq.s32.totalorder %s26, 0
    %p95 = por %p93, %p94
    %s96 = ssub.s32 %s27, %s39
    %p97 = scmp.eq.s32.totalorder %s96, 0
    %s99 = sadd.s32 %s98, 1
    %s100 = scalar_select %p97, %s98, %s99
    %p103 = pneg %p97
    %p104 = scmp.eq.s32.totalorder %s20, 1
    %p105 = por %p103, %p104
    %p106 = scmp.ne.s32.totalorder %s98, %s101
    %p107 = scmp.eq.s32.totalorder %s20, 0
    %p108 = por %p106, %p107
    %p109 = scmp.ne.s32.totalorder %s98, %s101
    %p110 = scmp.eq.s32.totalorder %s25, 1
    %p111 = por %p109, %p110
    %p112 = scmp.ne.s32.totalorder %s101, %s102
    %p113 = scmp.eq.s32.totalorder %s25, 0
    %p114 = por %p112, %p113
    %p115 = scmp.ne.s32.totalorder %s101, %s102
    %p116 = scmp.eq.s32.totalorder %s26, 1
    %p117 = por %p115, %p116
    %p119 = scmp.ne.s32.totalorder %s102, %s118
    %p120 = scmp.eq.s32.totalorder %s26, 0
    %p121 = por %p119, %p120
    %s122 = ssub.s32 %s27, %s39
    %p123 = scmp.eq.s32.totalorder %s122, 0
    %s125 = sadd.s32 %s124, 1
    %s126 = scalar_select %p123, %s124, %s125
    %p129 = pneg %p123
    %p130 = scmp.eq.s32.totalorder %s20, 1
    %p131 = por %p129, %p130
    %p132 = scmp.ne.s32.totalorder %s124, %s127
    %p133 = scmp.eq.s32.totalorder %s20, 0
    %p134 = por %p132, %p133
    %p135 = scmp.ne.s32.totalorder %s124, %s127
    %p136 = scmp.eq.s32.totalorder %s25, 1
    %p137 = por %p135, %p136
    %p138 = scmp.ne.s32.totalorder %s127, %s128
    %p139 = scmp.eq.s32.totalorder %s25, 0
    %p140 = por %p138, %p139
    %p141 = scmp.ne.s32.totalorder %s127, %s128
    %p142 = scmp.eq.s32.totalorder %s26, 1
    %p143 = por %p141, %p142
    %p145 = scmp.ne.s32.totalorder %s128, %s144
    %p146 = scmp.eq.s32.totalorder %s26, 0
    %p147 = por %p145, %p146
    %s148 = ssub.s32 %s27, %s39
    %p149 = scmp.eq.s32.totalorder %s148, 0
    %s151 = sadd.s32 %s150, 1
    %s152 = scalar_select %p149, %s150, %s151
    %p155 = pneg %p149
    %p156 = scmp.eq.s32.totalorder %s20, 1
    %p157 = por %p155, %p156
    %p158 = scmp.ne.s32.totalorder %s150, %s153
    %p159 = scmp.eq.s32.totalorder %s20, 0
    %p160 = por %p158, %p159
    %p161 = scmp.ne.s32.totalorder %s150, %s153
    %p162 = scmp.eq.s32.totalorder %s25, 1
    %p163 = por %p161, %p162
    %p164 = scmp.ne.s32.totalorder %s153, %s154
    %p165 = scmp.eq.s32.totalorder %s25, 0
    %p166 = por %p164, %p165
    %p167 = scmp.ne.s32.totalorder %s153, %s154
    %p168 = scmp.eq.s32.totalorder %s26, 1
    %p169 = por %p167, %p168
    %p171 = scmp.ne.s32.totalorder %s154, %s170
    %p172 = scmp.eq.s32.totalorder %s26, 0
    %p173 = por %p171, %p172
    %s174 = ssub.s32 %s27, %s39
    %p175 = scmp.eq.s32.totalorder %s174, 0
    %s177 = sadd.s32 %s176, 1
    %s178 = scalar_select %p175, %s176, %s177
    %p181 = pneg %p175
    %p182 = scmp.eq.s32.totalorder %s20, 1
    %p183 = por %p181, %p182
    %p184 = scmp.ne.s32.totalorder %s176, %s179
    %p185 = scmp.eq.s32.totalorder %s20, 0
    %p186 = por %p184, %p185
    %p187 = scmp.ne.s32.totalorder %s176, %s179
    %p188 = scmp.eq.s32.totalorder %s25, 1
    %p189 = por %p187, %p188
    %p190 = scmp.ne.s32.totalorder %s179, %s180
    %p191 = scmp.eq.s32.totalorder %s25, 0
    %p192 = por %p190, %p191
    %p193 = scmp.ne.s32.totalorder %s179, %s180
    %p194 = scmp.eq.s32.totalorder %s26, 1
    %p195 = por %p193, %p194
    %p197 = scmp.ne.s32.totalorder %s180, %s196
    %p198 = scmp.eq.s32.totalorder %s26, 0
    %p199 = por %p197, %p198
    %s200 = ssub.s32 %s27, %s39
    %p201 = scmp.eq.s32.totalorder %s200, 0
    %s203 = sadd.s32 %s202, 1
    %s204 = scalar_select %p201, %s202, %s203
    %p207 = pneg %p201
    %p208 = scmp.eq.s32.totalorder %s20, 1
    %p209 = por %p207, %p208
    %p210 = scmp.ne.s32.totalorder %s202, %s205
    %p211 = scmp.eq.s32.totalorder %s20, 0
    %p212 = por %p210, %p211
    %p213 = scmp.ne.s32.totalorder %s202, %s205
    %p214 = scmp.eq.s32.totalorder %s25, 1
    %p215 = por %p213, %p214
    %p216 = scmp.ne.s32.totalorder %s205, %s206
    %p217 = scmp.eq.s32.totalorder %s25, 0
    %p218 = por %p216, %p217
    %p219 = scmp.ne.s32.totalorder %s205, %s206
    %p220 = scmp.eq.s32.totalorder %s26, 1
    %p221 = por %p219, %p220
    %p223 = scmp.ne.s32.totalorder %s206, %s222
    %p224 = scmp.eq.s32.totalorder %s26, 0
    %p225 = por %p223, %p224
    %s226 = ssub.s32 %s27, %s39
    %p227 = scmp.eq.s32.totalorder %s226, 0
    %s229 = sadd.s32 %s228, 1
    %s230 = scalar_select %p227, %s228, %s229
    %p233 = pneg %p227
    %p234 = scmp.eq.s32.totalorder %s20, 1
    %p235 = por %p233, %p234
    %p236 = scmp.ne.s32.totalorder %s228, %s231
    %p237 = scmp.eq.s32.totalorder %s20, 0
    %p238 = por %p236, %p237
    %p239 = scmp.ne.s32.totalorder %s228, %s231
    %p240 = scmp.eq.s32.totalorder %s25, 1
    %p241 = por %p239, %p240
    %p242 = scmp.ne.s32.totalorder %s231, %s232
    %p243 = scmp.eq.s32.totalorder %s25, 0
    %p244 = por %p242, %p243
    %p245 = scmp.ne.s32.totalorder %s231, %s232
    %p246 = scmp.eq.s32.totalorder %s26, 1
    %p247 = por %p245, %p246
    %p249 = scmp.ne.s32.totalorder %s232, %s248
    %p250 = scmp.eq.s32.totalorder %s26, 0
    %p251 = por %p249, %p250
    %s252 = ssub.s32 %s27, %s39
    %p253 = scmp.eq.s32.totalorder %s252, 0
    %s255 = sadd.s32 %s254, 1
    %s256 = scalar_select %p253, %s254, %s255
    %p259 = pneg %p253
    %p260 = scmp.eq.s32.totalorder %s20, 1
    %p261 = por %p259, %p260
    %p262 = scmp.ne.s32.totalorder %s254, %s257
    %p263 = scmp.eq.s32.totalorder %s20, 0
    %p264 = por %p262, %p263
    %p265 = scmp.ne.s32.totalorder %s254, %s257
    %p266 = scmp.eq.s32.totalorder %s25, 1
    %p267 = por %p265, %p266
    %p268 = scmp.ne.s32.totalorder %s257, %s258
    %p269 = scmp.eq.s32.totalorder %s25, 0
    %p270 = por %p268, %p269
    %p271 = scmp.ne.s32.totalorder %s257, %s258
    %p272 = scmp.eq.s32.totalorder %s26, 1
    %p273 = por %p271, %p272
    %p275 = scmp.ne.s32.totalorder %s258, %s274
    %p276 = scmp.eq.s32.totalorder %s26, 0
    %p277 = por %p275, %p276
    %s278 = ssub.s32 %s27, %s39
    %p279 = scmp.eq.s32.totalorder %s278, 0
    %s281 = sadd.s32 %s280, 1
    %s282 = scalar_select %p279, %s280, %s281
    %p285 = pneg %p279
    %p286 = scmp.eq.s32.totalorder %s20, 1
    %p287 = por %p285, %p286
    %p288 = scmp.ne.s32.totalorder %s280, %s283
    %p289 = scmp.eq.s32.totalorder %s20, 0
    %p290 = por %p288, %p289
    %p291 = scmp.ne.s32.totalorder %s280, %s283
    %p292 = scmp.eq.s32.totalorder %s25, 1
    %p293 = por %p291, %p292
    %p294 = scmp.ne.s32.totalorder %s283, %s284
    %p295 = scmp.eq.s32.totalorder %s25, 0
    %p296 = por %p294, %p295
    %p297 = scmp.ne.s32.totalorder %s283, %s284
    %p298 = scmp.eq.s32.totalorder %s26, 1
    %p299 = por %p297, %p298
    %p301 = scmp.ne.s32.totalorder %s284, %s300
    %p302 = scmp.eq.s32.totalorder %s26, 0
    %p303 = por %p301, %p302
    %s304 = ssub.s32 %s27, %s39
    %p305 = scmp.eq.s32.totalorder %s304, 0
    %s307 = sadd.s32 %s306, 1
    %s308 = scalar_select %p305, %s306, %s307
    %p311 = pneg %p305
    %p312 = scmp.eq.s32.totalorder %s20, 1
    %p313 = por %p311, %p312
    %p314 = scmp.ne.s32.totalorder %s306, %s309
    %p315 = scmp.eq.s32.totalorder %s20, 0
    %p316 = por %p314, %p315
    %p317 = scmp.ne.s32.totalorder %s306, %s309
    %p318 = scmp.eq.s32.totalorder %s25, 1
    %p319 = por %p317, %p318
    %p320 = scmp.ne.s32.totalorder %s309, %s310
    %p321 = scmp.eq.s32.totalorder %s25, 0
    %p322 = por %p320, %p321
    %p323 = scmp.ne.s32.totalorder %s309, %s310
    %p324 = scmp.eq.s32.totalorder %s26, 1
    %p325 = por %p323, %p324
    %p327 = scmp.ne.s32.totalorder %s310, %s326
    %p328 = scmp.eq.s32.totalorder %s26, 0
    %p329 = por %p327, %p328
    %s330 = ssub.s32 %s27, %s39
    %p331 = scmp.eq.s32.totalorder %s330, 0
    %s333 = sadd.s32 %s332, 1
    %s334 = scalar_select %p331, %s332, %s333
    %p337 = pneg %p331
    %p338 = scmp.eq.s32.totalorder %s20, 1
    %p339 = por %p337, %p338
    %p340 = scmp.ne.s32.totalorder %s332, %s335
    %p341 = scmp.eq.s32.totalorder %s20, 0
    %p342 = por %p340, %p341
    %p343 = scmp.ne.s32.totalorder %s332, %s335
    %p344 = scmp.eq.s32.totalorder %s25, 1
    %p345 = por %p343, %p344
    %p346 = scmp.ne.s32.totalorder %s335, %s336
    %p347 = scmp.eq.s32.totalorder %s25, 0
    %p348 = por %p346, %p347
    %p349 = scmp.ne.s32.totalorder %s335, %s336
    %p350 = scmp.eq.s32.totalorder %s26, 1
    %p351 = por %p349, %p350
    %p353 = scmp.ne.s32.totalorder %s336, %s352
    %p354 = scmp.eq.s32.totalorder %s26, 0
    %p355 = por %p353, %p354
    %s356 = ssub.s32 %s27, %s39
    %p357 = scmp.eq.s32.totalorder %s356, 0
    %s359 = sadd.s32 %s358, 1
    %s360 = scalar_select %p357, %s358, %s359
    %p363 = pneg %p357
    %p364 = scmp.eq.s32.totalorder %s20, 1
    %p365 = por %p363, %p364
    %p366 = scmp.ne.s32.totalorder %s358, %s361
    %p367 = scmp.eq.s32.totalorder %s20, 0
    %p368 = por %p366, %p367
    %p369 = scmp.ne.s32.totalorder %s358, %s361
    %p370 = scmp.eq.s32.totalorder %s25, 1
    %p371 = por %p369, %p370
    %p372 = scmp.ne.s32.totalorder %s361, %s362
    %p373 = scmp.eq.s32.totalorder %s25, 0
    %p374 = por %p372, %p373
    %p375 = scmp.ne.s32.totalorder %s361, %s362
    %p376 = scmp.eq.s32.totalorder %s26, 1
    %p377 = por %p375, %p376
    %p379 = scmp.ne.s32.totalorder %s362, %s378
    %p380 = scmp.eq.s32.totalorder %s26, 0
    %p381 = por %p379, %p380
    %s382 = ssub.s32 %s27, %s39
    %p383 = scmp.eq.s32.totalorder %s382, 0
    %s385 = sadd.s32 %s384, 1
    %s386 = scalar_select %p383, %s384, %s385
    %p389 = pneg %p383
    %p390 = scmp.eq.s32.totalorder %s20, 1
    %p391 = por %p389, %p390
    %p392 = scmp.ne.s32.totalorder %s384, %s387
    %p393 = scmp.eq.s32.totalorder %s20, 0
    %p394 = por %p392, %p393
    %p395 = scmp.ne.s32.totalorder %s384, %s387
    %p396 = scmp.eq.s32.totalorder %s25, 1
    %p397 = por %p395, %p396
    %p398 = scmp.ne.s32.totalorder %s387, %s388
    %p399 = scmp.eq.s32.totalorder %s25, 0
    %p400 = por %p398, %p399
    %p401 = scmp.ne.s32.totalorder %s387, %s388
    %p402 = scmp.eq.s32.totalorder %s26, 1
    %p403 = por %p401, %p402
    %p405 = scmp.ne.s32.totalorder %s388, %s404
    %p406 = scmp.eq.s32.totalorder %s26, 0
    %p407 = por %p405, %p406
    %s408 = ssub.s32 %s27, %s39
    %s409 = ssub.s32 %s28, %s35
    %s410 = sor.u32 %s408, %s409
    %p411 = scmp.eq.s32.totalorder %s410, 0
    %s413 = sadd.s32 %s412, 1
    %s414 = scalar_select %p411, %s412, %s413
    %p417 = pneg %p411
    %p418 = scmp.eq.s32.totalorder %s20, 1
    %p419 = por %p417, %p418
    %p420 = scmp.ne.s32.totalorder %s412, %s415
    %p421 = scmp.eq.s32.totalorder %s20, 0
    %p422 = por %p420, %p421
    %p423 = scmp.ne.s32.totalorder %s412, %s415
    %p424 = scmp.eq.s32.totalorder %s25, 1
    %p425 = por %p423, %p424
    %p426 = scmp.ne.s32.totalorder %s415, %s416
    %p427 = scmp.eq.s32.totalorder %s25, 0
    %p428 = por %p426, %p427
    %p429 = scmp.ne.s32.totalorder %s415, %s416
    %p430 = scmp.eq.s32.totalorder %s26, 1
    %p431 = por %p429, %p430
    %p433 = scmp.ne.s32.totalorder %s416, %s432
    %p434 = scmp.eq.s32.totalorder %s26, 0
    %p435 = por %p433, %p434
    %p436 = scmp.le.s32.totalorder 1, %s20
    %p437 = scmp.lt.s32.totalorder %s20, 3
    %p438 = pnand %p436, %p437
    %p439 = pneg %p438
    // Predicated region
    $region9: #{bridge_tower_block.1} parent=5 // pred_check
      _
    $region10: #{bridge_tower_block.1} parent=5 // pred_check_branch
      %441 = sbr.rel (%p438) target = $region12
    $region11: #{bridge_tower_block.1} parent=5 // pred_region
      %s442 = ssub.s32 %s20, 1
    $region12: #{bridge_tower_block.1} parent=5 // pred_fallthru
      _
    %p443 = scmp.lt.s32.totalorder %s20, 2
    // Predicated region
    $region13: #{bridge_tower_block.1} parent=5 // pred_check
      %p444 = pneg %p443
    $region14: #{bridge_tower_block.1} parent=5 // pred_check_branch
      %446 = sbr.rel (%p444) target = $region16
    $region15: #{bridge_tower_block.1} parent=5 // pred_region
      // Predicated region
      $region17: #{bridge_tower_block.1} parent=15 // pred_check
        %p447 = pneg %p54
      $region18: #{bridge_tower_block.1} parent=15 // pred_check_branch
        %449 = sbr.rel (%p447) target = $region20
      $region19: #{bridge_tower_block.1} parent=15 // pred_region
        %p450 = scmp.lt.s32.totalorder %s27, 1
        %s451 = scalar_select %p450, %s27, 1
        %p452 = scmp.lt.s32.totalorder %s28, 0
        %s453 = scalar_select %p452, %s28, 0
        %s454 = smul.addr %s453, 2
        %s455 = smul.addr %s451, 2
        %s456 = sadd.s32 %s454, %s455
        %s457 = smul.addr %s456, 8
        %s458 = scalar_lea.vmem %s0, %s457
      $region20: #{bridge_tower_block.1} parent=15 // pred_fallthru
        _
      // Predicated region
      $region21: #{bridge_tower_block.1} parent=15 // pred_check
        %p459 = pneg %p82
      $region22: #{bridge_tower_block.1} parent=15 // pred_check_branch
        %461 = sbr.rel (%p459) target = $region24
      $region23: #{bridge_tower_block.1} parent=15 // pred_region
        %p462 = scmp.lt.s32.totalorder %s27, 1
        %s463 = scalar_select %p462, %s27, 1
        %p464 = scmp.lt.s32.totalorder %s28, 0
        %s465 = scalar_select %p464, %s28, 0
        %s466 = smul.addr %s465, 2
        %s467 = smul.addr %s463, 2
        %s468 = sadd.s32 %s466, %s467
        %s469 = smul.addr %s468, 8
        %s470 = scalar_lea.vmem %s1, %s469
      $region24: #{bridge_tower_block.1} parent=15 // pred_fallthru
        _
      // Predicated region
      $region25: #{bridge_tower_block.1} parent=15 // pred_check
        %p471 = pneg %p108
      $region26: #{bridge_tower_block.1} parent=15 // pred_check_branch
        %473 = sbr.rel (%p471) target = $region28
      $region27: #{bridge_tower_block.1} parent=15 // pred_region
        %p474 = scmp.lt.s32.totalorder %s27, 1
        %s475 = scalar_select %p474, %s27, 1
        %s476 = smul.addr %s475, 64
        %s477 = smul.addr %s476, 8
        %s478 = scalar_lea.vmem %s2, %s477
      $region28: #{bridge_tower_block.1} parent=15 // pred_fallthru
        _
      // Predicated region
      $region29: #{bridge_tower_block.1} parent=15 // pred_check
        %p479 = pneg %p134
      $region30: #{bridge_tower_block.1} parent=15 // pred_check_branch
        %481 = sbr.rel (%p479) target = $region32
      $region31: #{bridge_tower_block.1} parent=15 // pred_region
        %p482 = scmp.lt.s32.totalorder %s27, 1
        %s483 = scalar_select %p482, %s27, 1
        %s484 = smul.addr %s483, 2
        %s485 = scalar_lea.vmem %s3, %s484
      $region32: #{bridge_tower_block.1} parent=15 // pred_fallthru
        _
      // Predicated region
      $region33: #{bridge_tower_block.1} parent=15 // pred_check
        %p486 = pneg %p160
      $region34: #{bridge_tower_block.1} parent=15 // pred_check_branch
        %488 = sbr.rel (%p486) target = $region36
      $region35: #{bridge_tower_block.1} parent=15 // pred_region
        %p489 = scmp.lt.s32.totalorder %s27, 1
        %s490 = scalar_select %p489, %s27, 1
        %s491 = smul.addr %s490, 2
        %s492 = scalar_lea.vmem %s4, %s491
      $region36: #{bridge_tower_block.1} parent=15 // pred_fallthru
        _
      // Predicated region
      $region37: #{bridge_tower_block.1} parent=15 // pred_check
        %p493 = pneg %p186
      $region38: #{bridge_tower_block.1} parent=15 // pred_check_branch
        %495 = sbr.rel (%p493) target = $region40
      $region39: #{bridge_tower_block.1} parent=15 // pred_region
        %p496 = scmp.lt.s32.totalorder %s27, 1
        %s497 = scalar_select %p496, %s27, 1
        %s498 = smul.addr %s497, 2
        %s499 = scalar_lea.vmem %s5, %s498
      $region40: #{bridge_tower_block.1} parent=15 // pred_fallthru
        _
      // Predicated region
      $region41: #{bridge_tower_block.1} parent=15 // pred_check
        %p500 = pneg %p212
      $region42: #{bridge_tower_block.1} parent=15 // pred_check_branch
        %502 = sbr.rel (%p500) target = $region44
      $region43: #{bridge_tower_block.1} parent=15 // pred_region
        %p503 = scmp.lt.s32.totalorder %s27, 1
        %s504 = scalar_select %p503, %s27, 1
        %s505 = smul.addr %s504, 64
        %s506 = smul.addr %s505, 8
        %s507 = scalar_lea.vmem %s6, %s506
      $region44: #{bridge_tower_block.1} parent=15 // pred_fallthru
        _
      // Predicated region
      $region45: #{bridge_tower_block.1} parent=15 // pred_check
        %p508 = pneg %p238
      $region46: #{bridge_tower_block.1} parent=15 // pred_check_branch
        %510 = sbr.rel (%p508) target = $region48
      $region47: #{bridge_tower_block.1} parent=15 // pred_region
        %p511 = scmp.lt.s32.totalorder %s27, 1
        %s512 = scalar_select %p511, %s27, 1
        %s513 = smul.addr %s512, 2
        %s514 = scalar_lea.vmem %s7, %s513
      $region48: #{bridge_tower_block.1} parent=15 // pred_fallthru
        _
      // Predicated region
      $region49: #{bridge_tower_block.1} parent=15 // pred_check
        %p515 = pneg %p264
      $region50: #{bridge_tower_block.1} parent=15 // pred_check_branch
        %517 = sbr.rel (%p515) target = $region52
      $region51: #{bridge_tower_block.1} parent=15 // pred_region
        %p518 = scmp.lt.s32.totalorder %s27, 1
        %s519 = scalar_select %p518, %s27, 1
        %s520 = smul.addr %s519, 256
        %s521 = smul.addr %s520, 8
        %s522 = scalar_lea.vmem %s8, %s521
      $region52: #{bridge_tower_block.1} parent=15 // pred_fallthru
        _
      // Predicated region
      $region53: #{bridge_tower_block.1} parent=15 // pred_check
        %p523 = pneg %p290
      $region54: #{bridge_tower_block.1} parent=15 // pred_check_branch
        %525 = sbr.rel (%p523) target = $region56
      $region55: #{bridge_tower_block.1} parent=15 // pred_region
        %p526 = scmp.lt.s32.totalorder %s27, 1
        %s527 = scalar_select %p526, %s27, 1
        %s528 = smul.addr %s527, 8
        %s529 = scalar_lea.vmem %s9, %s528
      $region56: #{bridge_tower_block.1} parent=15 // pred_fallthru
        _
      // Predicated region
      $region57: #{bridge_tower_block.1} parent=15 // pred_check
        %p530 = pneg %p316
      $region58: #{bridge_tower_block.1} parent=15 // pred_check_branch
        %532 = sbr.rel (%p530) target = $region60
      $region59: #{bridge_tower_block.1} parent=15 // pred_region
        %p533 = scmp.lt.s32.totalorder %s27, 1
        %s534 = scalar_select %p533, %s27, 1
        %s535 = smul.addr %s534, 256
        %s536 = smul.addr %s535, 8
        %s537 = scalar_lea.vmem %s10, %s536
      $region60: #{bridge_tower_block.1} parent=15 // pred_fallthru
        _
      // Predicated region
      $region61: #{bridge_tower_block.1} parent=15 // pred_check
        %p538 = pneg %p342
      $region62: #{bridge_tower_block.1} parent=15 // pred_check_branch
        %540 = sbr.rel (%p538) target = $region64
      $region63: #{bridge_tower_block.1} parent=15 // pred_region
        %p541 = scmp.lt.s32.totalorder %s27, 1
        %s542 = scalar_select %p541, %s27, 1
        %s543 = smul.addr %s542, 2
        %s544 = scalar_lea.vmem %s11, %s543
      $region64: #{bridge_tower_block.1} parent=15 // pred_fallthru
        _
      // Predicated region
      $region65: #{bridge_tower_block.1} parent=15 // pred_check
        %p545 = pneg %p368
      $region66: #{bridge_tower_block.1} parent=15 // pred_check_branch
        %547 = sbr.rel (%p545) target = $region68
      $region67: #{bridge_tower_block.1} parent=15 // pred_region
        %p548 = scmp.lt.s32.totalorder %s27, 1
        %s549 = scalar_select %p548, %s27, 1
        %s550 = smul.addr %s549, 2
        %s551 = scalar_lea.vmem %s12, %s550
      $region68: #{bridge_tower_block.1} parent=15 // pred_fallthru
        _
      // Predicated region
      $region69: #{bridge_tower_block.1} parent=15 // pred_check
        %p552 = pneg %p394
      $region70: #{bridge_tower_block.1} parent=15 // pred_check_branch
        %554 = sbr.rel (%p552) target = $region72
      $region71: #{bridge_tower_block.1} parent=15 // pred_region
        %p555 = scmp.lt.s32.totalorder %s27, 1
        %s556 = scalar_select %p555, %s27, 1
        %s557 = smul.addr %s556, 2
        %s558 = scalar_lea.vmem %s13, %s557
      $region72: #{bridge_tower_block.1} parent=15 // pred_fallthru
        _
    $region16: #{bridge_tower_block.1} parent=5 // pred_fallthru
      _
    %p559 = scmp.le.s32.totalorder 1, %s20
    %p560 = scmp.lt.s32.totalorder %s20, 3
    %p561 = pnand %p559, %p560
    %p562 = pneg %p561
    // Predicated region
    $region73: #{bridge_tower_block.1} parent=5 // pred_check
      _
    $region74: #{bridge_tower_block.1} parent=5 // pred_check_branch
      %564 = sbr.rel (%p561) target = $region76
    $region75: #{bridge_tower_block.1} parent=5 // pred_region
      %s565 = ssub.s32 %s20, 1
      %p566 = scmp.lt.s32.totalorder %s29, 1
      %s567 = scalar_select %p566, %s29, 1
      %p568 = scmp.lt.s32.totalorder %s30, 0
      %s569 = scalar_select %p568, %s30, 0
      %s570 = smul.addr %s569, 2
      %s571 = smul.addr %s567, 2
      %s572 = sadd.s32 %s570, %s571
      %s573 = smul.addr %s572, 8
      %s574 = scalar_lea.vmem %s0, %s573
      %p575 = pneg %p60
      %p576 = pneg %p57
      %p577 = scmp.lt.s32.totalorder %s29, 1
      %s578 = scalar_select %p577, %s29, 1
      %p579 = scmp.lt.s32.totalorder %s30, 0
      %s580 = scalar_select %p579, %s30, 0
      %s581 = smul.addr %s580, 2
      %s582 = smul.addr %s578, 2
      %s583 = sadd.s32 %s581, %s582
      %s584 = smul.addr %s583, 8
      %s585 = scalar_lea.vmem %s1, %s584
      %p586 = pneg %p88
      %p587 = pneg %p85
      %p588 = scmp.lt.s32.totalorder %s29, 1
      %s589 = scalar_select %p588, %s29, 1
      %s590 = smul.addr %s589, 64
      %s591 = smul.addr %s590, 8
      %s592 = scalar_lea.vmem %s2, %s591
      %p593 = pneg %p114
      %p594 = pneg %p111
      %p595 = scmp.lt.s32.totalorder %s29, 1
      %s596 = scalar_select %p595, %s29, 1
      %s597 = smul.addr %s596, 2
      %s598 = scalar_lea.vmem %s3, %s597
      %p599 = pneg %p140
      %p600 = pneg %p137
      %p601 = scmp.lt.s32.totalorder %s29, 1
      %s602 = scalar_select %p601, %s29, 1
      %s603 = smul.addr %s602, 2
      %s604 = scalar_lea.vmem %s4, %s603
      %p605 = pneg %p166
      %p606 = pneg %p163
      %p607 = scmp.lt.s32.totalorder %s29, 1
      %s608 = scalar_select %p607, %s29, 1
      %s609 = smul.addr %s608, 2
      %s610 = scalar_lea.vmem %s5, %s609
      %p611 = pneg %p192
      %p612 = pneg %p189
      %p613 = scmp.lt.s32.totalorder %s29, 1
      %s614 = scalar_select %p613, %s29, 1
      %s615 = smul.addr %s614, 64
      %s616 = smul.addr %s615, 8
      %s617 = scalar_lea.vmem %s6, %s616
      %p618 = pneg %p218
      %p619 = pneg %p215
      %p620 = scmp.lt.s32.totalorder %s29, 1
      %s621 = scalar_select %p620, %s29, 1
      %s622 = smul.addr %s621, 2
      %s623 = scalar_lea.vmem %s7, %s622
      %p624 = pneg %p244
      %p625 = pneg %p241
      %p626 = scmp.lt.s32.totalorder %s29, 1
      %s627 = scalar_select %p626, %s29, 1
      %s628 = smul.addr %s627, 256
      %s629 = smul.addr %s628, 8
      %s630 = scalar_lea.vmem %s8, %s629
      %p631 = pneg %p270
      %p632 = pneg %p267
      %p633 = scmp.lt.s32.totalorder %s29, 1
      %s634 = scalar_select %p633, %s29, 1
      %s635 = smul.addr %s634, 8
      %s636 = scalar_lea.vmem %s9, %s635
      %p637 = pneg %p296
      %p638 = pneg %p293
      %p639 = scmp.lt.s32.totalorder %s29, 1
      %s640 = scalar_select %p639, %s29, 1
      %s641 = smul.addr %s640, 256
      %s642 = smul.addr %s641, 8
      %s643 = scalar_lea.vmem %s10, %s642
      %p644 = pneg %p322
      %p645 = pneg %p319
      %p646 = scmp.lt.s32.totalorder %s29, 1
      %s647 = scalar_select %p646, %s29, 1
      %s648 = smul.addr %s647, 2
      %s649 = scalar_lea.vmem %s11, %s648
      %p650 = pneg %p348
      %p651 = pneg %p345
      %p652 = scmp.lt.s32.totalorder %s29, 1
      %s653 = scalar_select %p652, %s29, 1
      %s654 = smul.addr %s653, 2
      %s655 = scalar_lea.vmem %s12, %s654
      %p656 = pneg %p374
      %p657 = pneg %p371
      %p658 = scmp.lt.s32.totalorder %s29, 1
      %s659 = scalar_select %p658, %s29, 1
      %s660 = smul.addr %s659, 2
      %s661 = scalar_lea.vmem %s13, %s660
      %p662 = pneg %p400
      %p663 = pneg %p397
      %p664 = pneg %p428
      %p665 = pneg %p425
      %p666 = scmp.lt.s32.totalorder %s29, 1
      %s667 = scalar_select %p666, %s29, 1
      %p668 = scmp.lt.s32.totalorder %s30, 0
      %s669 = scalar_select %p668, %s30, 0
      %s670 = smul.addr %s669, 2
      %s671 = smul.addr %s667, 2
      %s672 = sadd.s32 %s670, %s671
      %s673 = smul.addr %s672, 8
      %s674 = scalar_lea.vmem %s14, %s673
      %p675 = scmp.lt.s32.totalorder %s29, 1
      %s676 = scalar_select %p675, %s29, 1
      %p677 = scmp.lt.s32.totalorder %s30, 0
      %s678 = scalar_select %p677, %s30, 0
      %s679 = smul.addr %s678, 2
      %s680 = smul.addr %s676, 2
      %s681 = sadd.s32 %s679, %s680
      %s682 = smul.addr %s681, 8
      %s683 = scalar_lea.vmem %s0, %s682
      %p684 = scmp.lt.s32.totalorder %s29, 1
      %s685 = scalar_select %p684, %s29, 1
      %p686 = scmp.lt.s32.totalorder %s30, 0
      %s687 = scalar_select %p686, %s30, 0
      %s688 = smul.addr %s687, 2
      %s689 = smul.addr %s685, 2
      %s690 = sadd.s32 %s688, %s689
      %s691 = smul.addr %s690, 8
      %s692 = scalar_lea.vmem %s1, %s691
      %p693 = scmp.lt.s32.totalorder %s29, 1
      %s694 = scalar_select %p693, %s29, 1
      %s695 = smul.addr %s694, 64
      %s696 = smul.addr %s695, 8
      %s697 = scalar_lea.vmem %s2, %s696
      %p698 = scmp.lt.s32.totalorder %s29, 1
      %s699 = scalar_select %p698, %s29, 1
      %s700 = smul.addr %s699, 2
      %s701 = scalar_lea.vmem %s3, %s700
      %p702 = scmp.lt.s32.totalorder %s29, 1
      %s703 = scalar_select %p702, %s29, 1
      %s704 = smul.addr %s703, 2
      %s705 = scalar_lea.vmem %s4, %s704
      %p706 = scmp.lt.s32.totalorder %s29, 1
      %s707 = scalar_select %p706, %s29, 1
      %s708 = smul.addr %s707, 2
      %s709 = scalar_lea.vmem %s5, %s708
      %p710 = scmp.lt.s32.totalorder %s29, 1
      %s711 = scalar_select %p710, %s29, 1
      %s712 = smul.addr %s711, 64
      %s713 = smul.addr %s712, 8
      %s714 = scalar_lea.vmem %s6, %s713
      %p715 = scmp.lt.s32.totalorder %s29, 1
      %s716 = scalar_select %p715, %s29, 1
      %s717 = smul.addr %s716, 2
      %s718 = scalar_lea.vmem %s7, %s717
      %p719 = scmp.lt.s32.totalorder %s29, 1
      %s720 = scalar_select %p719, %s29, 1
      %s721 = smul.addr %s720, 256
      %s722 = smul.addr %s721, 8
      %s723 = scalar_lea.vmem %s8, %s722
      %p724 = scmp.lt.s32.totalorder %s29, 1
      %s725 = scalar_select %p724, %s29, 1
      %s726 = smul.addr %s725, 8
      %s727 = scalar_lea.vmem %s9, %s726
      %p728 = scmp.lt.s32.totalorder %s29, 1
      %s729 = scalar_select %p728, %s29, 1
      %s730 = smul.addr %s729, 256
      %s731 = smul.addr %s730, 8
      %s732 = scalar_lea.vmem %s10, %s731
      %p733 = scmp.lt.s32.totalorder %s29, 1
      %s734 = scalar_select %p733, %s29, 1
      %s735 = smul.addr %s734, 2
      %s736 = scalar_lea.vmem %s11, %s735
      %p737 = scmp.lt.s32.totalorder %s29, 1
      %s738 = scalar_select %p737, %s29, 1
      %s739 = smul.addr %s738, 2
      %s740 = scalar_lea.vmem %s12, %s739
      %p741 = scmp.lt.s32.totalorder %s29, 1
      %s742 = scalar_select %p741, %s29, 1
      %s743 = smul.addr %s742, 2
      %s744 = scalar_lea.vmem %s13, %s743
      %p745 = scmp.lt.s32.totalorder %s29, 1
      %s746 = scalar_select %p745, %s29, 1
      %p747 = scmp.lt.s32.totalorder %s30, 0
      %s748 = scalar_select %p747, %s30, 0
      %s749 = smul.addr %s748, 2
      %s750 = smul.addr %s746, 2
      %s751 = sadd.s32 %s749, %s750
      %s752 = smul.addr %s751, 8
      %s753 = scalar_lea.vmem %s14, %s752
      %v754 = vld [vmem:[%s683] sm:$0xff]
      %v755 = vld [vmem:[%s683 + $0x8] sm:$0xff]
      %v756 = vld [vmem:[%s692] sm:$0xff]
      %v757 = vld [vmem:[%s692 + $0x8] sm:$0xff]
      %v758 = vpack.c.bf16 %v756, %v756
      %v759 = vpack.c.bf16 %v757, %v757
      %v760 = vld [vmem:[%s697] sm:$0xff]
      %v761 = vld [vmem:[%s697 + $0x8] sm:$0xff]
      %v762 = vld [vmem:[%s697 + $0x10] sm:$0xff]
      %v763 = vld [vmem:[%s697 + $0x18] sm:$0xff]
      %v764 = vld [vmem:[%s697 + $0x20] sm:$0xff]
      %v765 = vld [vmem:[%s697 + $0x28] sm:$0xff]
      %v766 = vld [vmem:[%s697 + $0x30] sm:$0xff]
      %v767 = vld [vmem:[%s697 + $0x38] sm:$0xff]
      %v768 = vld [vmem:[%s697 + $0x40] sm:$0xff]
      %v769 = vld [vmem:[%s697 + $0x48] sm:$0xff]
      %v770 = vld [vmem:[%s697 + $0x50] sm:$0xff]
      %v771 = vld [vmem:[%s697 + $0x58] sm:$0xff]
      %v772 = vld [vmem:[%s697 + $0x60] sm:$0xff]
      %v773 = vld [vmem:[%s697 + $0x68] sm:$0xff]
      %v774 = vld [vmem:[%s697 + $0x70] sm:$0xff]
      %v775 = vld [vmem:[%s697 + $0x78] sm:$0xff]
      %v776 = vld [vmem:[%s697 + $0x80] sm:$0xff]
      %v777 = vld [vmem:[%s697 + $0x88] sm:$0xff]
      %v778 = vld [vmem:[%s697 + $0x90] sm:$0xff]
      %v779 = vld [vmem:[%s697 + $0x98] sm:$0xff]
      %v780 = vld [vmem:[%s697 + $0xa0] sm:$0xff]
      %v781 = vld [vmem:[%s697 + $0xa8] sm:$0xff]
      %v782 = vld [vmem:[%s697 + $0xb0] sm:$0xff]
      %v783 = vld [vmem:[%s697 + $0xb8] sm:$0xff]
      %v784 = vld [vmem:[%s697 + $0xc0] sm:$0xff]
      %v785 = vld [vmem:[%s697 + $0xc8] sm:$0xff]
      %v786 = vld [vmem:[%s697 + $0xd0] sm:$0xff]
      %v787 = vld [vmem:[%s697 + $0xd8] sm:$0xff]
      %v788 = vld [vmem:[%s697 + $0xe0] sm:$0xff]
      %v789 = vld [vmem:[%s697 + $0xe8] sm:$0xff]
      %v790 = vld [vmem:[%s697 + $0xf0] sm:$0xff]
      %v791 = vld [vmem:[%s697 + $0xf8] sm:$0xff]
      %v792 = vld [vmem:[%s697 + $0x100] sm:$0xff]
      %v793 = vld [vmem:[%s697 + $0x108] sm:$0xff]
      %v794 = vld [vmem:[%s697 + $0x110] sm:$0xff]
      %v795 = vld [vmem:[%s697 + $0x118] sm:$0xff]
      %v796 = vld [vmem:[%s697 + $0x120] sm:$0xff]
      %v797 = vld [vmem:[%s697 + $0x128] sm:$0xff]
      %v798 = vld [vmem:[%s697 + $0x130] sm:$0xff]
      %v799 = vld [vmem:[%s697 + $0x138] sm:$0xff]
      %v800 = vld [vmem:[%s697 + $0x140] sm:$0xff]
      %v801 = vld [vmem:[%s697 + $0x148] sm:$0xff]
      %v802 = vld [vmem:[%s697 + $0x150] sm:$0xff]
      %v803 = vld [vmem:[%s697 + $0x158] sm:$0xff]
      %v804 = vld [vmem:[%s697 + $0x160] sm:$0xff]
      %v805 = vld [vmem:[%s697 + $0x168] sm:$0xff]
      %v806 = vld [vmem:[%s697 + $0x170] sm:$0xff]
      %v807 = vld [vmem:[%s697 + $0x178] sm:$0xff]
      %v808 = vld [vmem:[%s697 + $0x180] sm:$0xff]
      %v809 = vld [vmem:[%s697 + $0x188] sm:$0xff]
      %v810 = vld [vmem:[%s697 + $0x190] sm:$0xff]
      %v811 = vld [vmem:[%s697 + $0x198] sm:$0xff]
      %v812 = vld [vmem:[%s697 + $0x1a0] sm:$0xff]
      %v813 = vld [vmem:[%s697 + $0x1a8] sm:$0xff]
      %v814 = vld [vmem:[%s697 + $0x1b0] sm:$0xff]
      %v815 = vld [vmem:[%s697 + $0x1b8] sm:$0xff]
      %v816 = vld [vmem:[%s697 + $0x1c0] sm:$0xff]
      %v817 = vld [vmem:[%s697 + $0x1c8] sm:$0xff]
      %v818 = vld [vmem:[%s697 + $0x1d0] sm:$0xff]
      %v819 = vld [vmem:[%s697 + $0x1d8] sm:$0xff]
      %v820 = vld [vmem:[%s697 + $0x1e0] sm:$0xff]
      %v821 = vld [vmem:[%s697 + $0x1e8] sm:$0xff]
      %v822 = vld [vmem:[%s697 + $0x1f0] sm:$0xff]
      %v823 = vld [vmem:[%s697 + $0x1f8] sm:$0xff]
      %v824 = vpack.c.bf16 %v762, %v760
      %v825 = vpack.c.bf16 %v763, %v761
      %v826 = vpack.c.bf16 %v766, %v764
      %v827 = vpack.c.bf16 %v767, %v765
      %v828 = vpack.c.bf16 %v770, %v768
      %v829 = vpack.c.bf16 %v771, %v769
      %v830 = vpack.c.bf16 %v774, %v772
      %v831 = vpack.c.bf16 %v775, %v773
      %v832 = vpack.c.bf16 %v778, %v776
      %v833 = vpack.c.bf16 %v779, %v777
      %v834 = vpack.c.bf16 %v782, %v780
      %v835 = vpack.c.bf16 %v783, %v781
      %v836 = vpack.c.bf16 %v786, %v784
      %v837 = vpack.c.bf16 %v787, %v785
      %v838 = vpack.c.bf16 %v790, %v788
      %v839 = vpack.c.bf16 %v791, %v789
      %v840 = vpack.c.bf16 %v794, %v792
      %v841 = vpack.c.bf16 %v795, %v793
      %v842 = vpack.c.bf16 %v798, %v796
      %v843 = vpack.c.bf16 %v799, %v797
      %v844 = vpack.c.bf16 %v802, %v800
      %v845 = vpack.c.bf16 %v803, %v801
      %v846 = vpack.c.bf16 %v806, %v804
      %v847 = vpack.c.bf16 %v807, %v805
      %v848 = vpack.c.bf16 %v810, %v808
      %v849 = vpack.c.bf16 %v811, %v809
      %v850 = vpack.c.bf16 %v814, %v812
      %v851 = vpack.c.bf16 %v815, %v813
      %v852 = vpack.c.bf16 %v818, %v816
      %v853 = vpack.c.bf16 %v819, %v817
      %v854 = vpack.c.bf16 %v822, %v820
      %v855 = vpack.c.bf16 %v823, %v821
      %v856 = vld [vmem:[%s701] sm:$0x3]
      %v858 = vperm.slane %v856, 0
      %v859 = vperm.slane %v856, 1
      %862 = vmatpush.bf16.msra.mxu0 %v838
      %863 = vmatpush.bf16.msra.mxu0 %v836
      %864 = vmatpush.bf16.msra.mxu0 %v834
      %865 = vmatpush.bf16.msra.mxu0 %v832
      %866 = vmatpush.bf16.msra.mxu0 %v830
      %867 = vmatpush.bf16.msra.mxu0 %v828
      %868 = vmatpush.bf16.msra.mxu0 %v826
      %869 = vmatpush.bf16.msra.mxu0 %v824
      %870 = vmatmul.bf16.gmra.mxu0 %v758
      %v871 = vpop.f32.mrf.mxu0
      %v872 = vadd.f32 %v858, %v871
      %v873 = vpop.f32.mrf.mxu0
      %874 = vdwg.mxu0
      %875 = vmatpush.bf16.msra.mxu0 %v854
      %876 = vmatpush.bf16.msra.mxu0 %v852
      %877 = vmatpush.bf16.msra.mxu0 %v850
      %878 = vmatpush.bf16.msra.mxu0 %v848
      %879 = vmatpush.bf16.msra.mxu0 %v846
      %880 = vmatpush.bf16.msra.mxu0 %v844
      %881 = vmatpush.bf16.msra.mxu0 %v842
      %882 = vmatpush.bf16.msra.mxu0 %v840
      %883 = vmatmul.bf16.gmra.mxu0 %v759
      %v884 = vpop.f32.mrf.mxu0
      %v885 = vadd.f32 %v872, %v884
      %v886 = vpop.f32.mrf.mxu0
      %887 = vdwg.mxu0
      %888 = vmatpush.bf16.msra.mxu0 %v839
      %889 = vmatpush.bf16.msra.mxu0 %v837
      %890 = vmatpush.bf16.msra.mxu0 %v835
      %891 = vmatpush.bf16.msra.mxu0 %v833
      %892 = vmatpush.bf16.msra.mxu0 %v831
      %893 = vmatpush.bf16.msra.mxu0 %v829
      %894 = vmatpush.bf16.msra.mxu0 %v827
      %895 = vmatpush.bf16.msra.mxu0 %v825
      %896 = vmatmul.bf16.gmra.mxu0 %v758
      %v897 = vpop.f32.mrf.mxu0
      %v898 = vadd.f32 %v859, %v897
      %v899 = vpop.f32.mrf.mxu0
      %900 = vdwg.mxu0
      %901 = vmatpush.bf16.msra.mxu0 %v855
      %902 = vmatpush.bf16.msra.mxu0 %v853
      %903 = vmatpush.bf16.msra.mxu0 %v851
      %904 = vmatpush.bf16.msra.mxu0 %v849
      %905 = vmatpush.bf16.msra.mxu0 %v847
      %906 = vmatpush.bf16.msra.mxu0 %v845
      %907 = vmatpush.bf16.msra.mxu0 %v843
      %908 = vmatpush.bf16.msra.mxu0 %v841
      %909 = vmatmul.bf16.gmra.mxu0 %v759
      %v910 = vpop.f32.mrf.mxu0
      %v911 = vadd.f32 %v898, %v910
      %v912 = vpop.f32.mrf.mxu0
      %913 = vdwg.mxu0
      %v914 = vmax.f32 %v885, 0.0
      %v915 = vmax.f32 %v911, 0.0
      %v916 = vadd.f32 %v914, %v754
      %v917 = vadd.f32 %v915, %v755
      %v918 = vadd.f32 %v754, %v916
      %v919 = vadd.f32 %v755, %v917
      %v920 = vadd.f32 %v918, %v919
      %921 = vadd.xlane.f32.xlu0 %v920
      %v922 = vpop.xlane.xlu0 %921
      %v923 = vmul.f32 %v922, 0.00390625
      %v924 = vsub.f32 %v918, %v923
      %v925 = vsub.f32 %v919, %v923
      %v926 = vmul.f32 %v924, %v924
      %v927 = vmul.f32 %v925, %v925
      %v928 = vadd.f32 %v926, %v927
      %929 = vadd.xlane.f32.xlu0 %v928
      %v930 = vpop.xlane.xlu0 %929
      %v931 = vmul.f32 %v930, 0.00390625
      %v932 = vadd.f32 %v931, 1e-05
      %v933 = vrsqrt.pop %v932
      %v934 = vmul.f32 %v933, %v932
      %v935 = vmul.f32 %v934, %v933
      %v936 = vmul.f32 0.5, %v935
      %v937 = vsub.f32 1.5, %v936
      %v938 = vmul.f32 %v933, %v937
      %vm939 = vweird.f32 %v932
      %vm940 = vweird.f32 %v933
      %vm941 = vmor %vm939, %vm940
      %v942 = vsel %vm941, %v933, %v938
      %v943 = vmul.f32 %v924, %v942
      %v944 = vmul.f32 %v925, %v942
      %v945 = vld [vmem:[%s705] sm:$0x3]
      %v947 = vperm.slane %v945, 0
      %v948 = vperm.slane %v945, 1
      %v951 = vmul.f32 %v943, %v947
      %v952 = vmul.f32 %v944, %v948
      %v953 = vld [vmem:[%s709] sm:$0x3]
      %v955 = vperm.slane %v953, 0
      %v956 = vperm.slane %v953, 1
      %v959 = vadd.f32 %v951, %v955
      %v960 = vadd.f32 %v952, %v956
      %v961 = vpack.c.bf16 %v959, %v959
      %v962 = vpack.c.bf16 %v960, %v960
      %v963 = vld [vmem:[%s714] sm:$0xff]
      %v964 = vld [vmem:[%s714 + $0x8] sm:$0xff]
      %v965 = vld [vmem:[%s714 + $0x10] sm:$0xff]
      %v966 = vld [vmem:[%s714 + $0x18] sm:$0xff]
      %v967 = vld [vmem:[%s714 + $0x20] sm:$0xff]
      %v968 = vld [vmem:[%s714 + $0x28] sm:$0xff]
      %v969 = vld [vmem:[%s714 + $0x30] sm:$0xff]
      %v970 = vld [vmem:[%s714 + $0x38] sm:$0xff]
      %v971 = vld [vmem:[%s714 + $0x40] sm:$0xff]
      %v972 = vld [vmem:[%s714 + $0x48] sm:$0xff]
      %v973 = vld [vmem:[%s714 + $0x50] sm:$0xff]
      %v974 = vld [vmem:[%s714 + $0x58] sm:$0xff]
      %v975 = vld [vmem:[%s714 + $0x60] sm:$0xff]
      %v976 = vld [vmem:[%s714 + $0x68] sm:$0xff]
      %v977 = vld [vmem:[%s714 + $0x70] sm:$0xff]
      %v978 = vld [vmem:[%s714 + $0x78] sm:$0xff]
      %v979 = vld [vmem:[%s714 + $0x80] sm:$0xff]
      %v980 = vld [vmem:[%s714 + $0x88] sm:$0xff]
      %v981 = vld [vmem:[%s714 + $0x90] sm:$0xff]
      %v982 = vld [vmem:[%s714 + $0x98] sm:$0xff]
      %v983 = vld [vmem:[%s714 + $0xa0] sm:$0xff]
      %v984 = vld [vmem:[%s714 + $0xa8] sm:$0xff]
      %v985 = vld [vmem:[%s714 + $0xb0] sm:$0xff]
      %v986 = vld [vmem:[%s714 + $0xb8] sm:$0xff]
      %v987 = vld [vmem:[%s714 + $0xc0] sm:$0xff]
      %v988 = vld [vmem:[%s714 + $0xc8] sm:$0xff]
      %v989 = vld [vmem:[%s714 + $0xd0] sm:$0xff]
      %v990 = vld [vmem:[%s714 + $0xd8] sm:$0xff]
      %v991 = vld [vmem:[%s714 + $0xe0] sm:$0xff]
      %v992 = vld [vmem:[%s714 + $0xe8] sm:$0xff]
      %v993 = vld [vmem:[%s714 + $0xf0] sm:$0xff]
      %v994 = vld [vmem:[%s714 + $0xf8] sm:$0xff]
      %v995 = vld [vmem:[%s714 + $0x100] sm:$0xff]
      %v996 = vld [vmem:[%s714 + $0x108] sm:$0xff]
      %v997 = vld [vmem:[%s714 + $0x110] sm:$0xff]
      %v998 = vld [vmem:[%s714 + $0x118] sm:$0xff]
      %v999 = vld [vmem:[%s714 + $0x120] sm:$0xff]
      %v1000 = vld [vmem:[%s714 + $0x128] sm:$0xff]
      %v1001 = vld [vmem:[%s714 + $0x130] sm:$0xff]
      %v1002 = vld [vmem:[%s714 + $0x138] sm:$0xff]
      %v1003 = vld [vmem:[%s714 + $0x140] sm:$0xff]
      %v1004 = vld [vmem:[%s714 + $0x148] sm:$0xff]
      %v1005 = vld [vmem:[%s714 + $0x150] sm:$0xff]
      %v1006 = vld [vmem:[%s714 + $0x158] sm:$0xff]
      %v1007 = vld [vmem:[%s714 + $0x160] sm:$0xff]
      %v1008 = vld [vmem:[%s714 + $0x168] sm:$0xff]
      %v1009 = vld [vmem:[%s714 + $0x170] sm:$0xff]
      %v1010 = vld [vmem:[%s714 + $0x178] sm:$0xff]
      %v1011 = vld [vmem:[%s714 + $0x180] sm:$0xff]
      %v1012 = vld [vmem:[%s714 + $0x188] sm:$0xff]
      %v1013 = vld [vmem:[%s714 + $0x190] sm:$0xff]
      %v1014 = vld [vmem:[%s714 + $0x198] sm:$0xff]
      %v1015 = vld [vmem:[%s714 + $0x1a0] sm:$0xff]
      %v1016 = vld [vmem:[%s714 + $0x1a8] sm:$0xff]
      %v1017 = vld [vmem:[%s714 + $0x1b0] sm:$0xff]
      %v1018 = vld [vmem:[%s714 + $0x1b8] sm:$0xff]
      %v1019 = vld [vmem:[%s714 + $0x1c0] sm:$0xff]
      %v1020 = vld [vmem:[%s714 + $0x1c8] sm:$0xff]
      %v1021 = vld [vmem:[%s714 + $0x1d0] sm:$0xff]
      %v1022 = vld [vmem:[%s714 + $0x1d8] sm:$0xff]
      %v1023 = vld [vmem:[%s714 + $0x1e0] sm:$0xff]
      %v1024 = vld [vmem:[%s714 + $0x1e8] sm:$0xff]
      %v1025 = vld [vmem:[%s714 + $0x1f0] sm:$0xff]
      %v1026 = vld [vmem:[%s714 + $0x1f8] sm:$0xff]
      %v1027 = vpack.c.bf16 %v965, %v963
      %v1028 = vpack.c.bf16 %v966, %v964
      %v1029 = vpack.c.bf16 %v969, %v967
      %v1030 = vpack.c.bf16 %v970, %v968
      %v1031 = vpack.c.bf16 %v973, %v971
      %v1032 = vpack.c.bf16 %v974, %v972
      %v1033 = vpack.c.bf16 %v977, %v975
      %v1034 = vpack.c.bf16 %v978, %v976
      %v1035 = vpack.c.bf16 %v981, %v979
      %v1036 = vpack.c.bf16 %v982, %v980
      %v1037 = vpack.c.bf16 %v985, %v983
      %v1038 = vpack.c.bf16 %v986, %v984
      %v1039 = vpack.c.bf16 %v989, %v987
      %v1040 = vpack.c.bf16 %v990, %v988
      %v1041 = vpack.c.bf16 %v993, %v991
      %v1042 = vpack.c.bf16 %v994, %v992
      %v1043 = vpack.c.bf16 %v997, %v995
      %v1044 = vpack.c.bf16 %v998, %v996
      %v1045 = vpack.c.bf16 %v1001, %v999
      %v1046 = vpack.c.bf16 %v1002, %v1000
      %v1047 = vpack.c.bf16 %v1005, %v1003
      %v1048 = vpack.c.bf16 %v1006, %v1004
      %v1049 = vpack.c.bf16 %v1009, %v1007
      %v1050 = vpack.c.bf16 %v1010, %v1008
      %v1051 = vpack.c.bf16 %v1013, %v1011
      %v1052 = vpack.c.bf16 %v1014, %v1012
      %v1053 = vpack.c.bf16 %v1017, %v1015
      %v1054 = vpack.c.bf16 %v1018, %v1016
      %v1055 = vpack.c.bf16 %v1021, %v1019
      %v1056 = vpack.c.bf16 %v1022, %v1020
      %v1057 = vpack.c.bf16 %v1025, %v1023
      %v1058 = vpack.c.bf16 %v1026, %v1024
      %v1059 = vld [vmem:[%s718] sm:$0x3]
      %v1061 = vperm.slane %v1059, 0
      %v1062 = vperm.slane %v1059, 1
      %1065 = vmatpush.bf16.msra.mxu0 %v1041
      %1066 = vmatpush.bf16.msra.mxu0 %v1039
      %1067 = vmatpush.bf16.msra.mxu0 %v1037
      %1068 = vmatpush.bf16.msra.mxu0 %v1035
      %1069 = vmatpush.bf16.msra.mxu0 %v1033
      %1070 = vmatpush.bf16.msra.mxu0 %v1031
      %1071 = vmatpush.bf16.msra.mxu0 %v1029
      %1072 = vmatpush.bf16.msra.mxu0 %v1027
      %1073 = vmatmul.bf16.gmra.mxu0 %v961
      %v1074 = vpop.f32.mrf.mxu0
      %v1075 = vadd.f32 %v1061, %v1074
      %v1076 = vpop.f32.mrf.mxu0
      %1077 = vdwg.mxu0
      %1078 = vmatpush.bf16.msra.mxu0 %v1057
      %1079 = vmatpush.bf16.msra.mxu0 %v1055
      %1080 = vmatpush.bf16.msra.mxu0 %v1053
      %1081 = vmatpush.bf16.msra.mxu0 %v1051
      %1082 = vmatpush.bf16.msra.mxu0 %v1049
      %1083 = vmatpush.bf16.msra.mxu0 %v1047
      %1084 = vmatpush.bf16.msra.mxu0 %v1045
      %1085 = vmatpush.bf16.msra.mxu0 %v1043
      %1086 = vmatmul.bf16.gmra.mxu0 %v962
      %v1087 = vpop.f32.mrf.mxu0
      %v1088 = vadd.f32 %v1075, %v1087
      %v1089 = vpop.f32.mrf.mxu0
      %1090 = vdwg.mxu0
      %1091 = vmatpush.bf16.msra.mxu0 %v1042
      %1092 = vmatpush.bf16.msra.mxu0 %v1040
      %1093 = vmatpush.bf16.msra.mxu0 %v1038
      %1094 = vmatpush.bf16.msra.mxu0 %v1036
      %1095 = vmatpush.bf16.msra.mxu0 %v1034
      %1096 = vmatpush.bf16.msra.mxu0 %v1032
      %1097 = vmatpush.bf16.msra.mxu0 %v1030
      %1098 = vmatpush.bf16.msra.mxu0 %v1028
      %1099 = vmatmul.bf16.gmra.mxu0 %v961
      %v1100 = vpop.f32.mrf.mxu0
      %v1101 = vadd.f32 %v1062, %v1100
      %v1102 = vpop.f32.mrf.mxu0
      %1103 = vdwg.mxu0
      %1104 = vmatpush.bf16.msra.mxu0 %v1058
      %1105 = vmatpush.bf16.msra.mxu0 %v1056
      %1106 = vmatpush.bf16.msra.mxu0 %v1054
      %1107 = vmatpush.bf16.msra.mxu0 %v1052
      %1108 = vmatpush.bf16.msra.mxu0 %v1050
      %1109 = vmatpush.bf16.msra.mxu0 %v1048
      %1110 = vmatpush.bf16.msra.mxu0 %v1046
      %1111 = vmatpush.bf16.msra.mxu0 %v1044
      %1112 = vmatmul.bf16.gmra.mxu0 %v962
      %v1113 = vpop.f32.mrf.mxu0
      %v1114 = vadd.f32 %v1101, %v1113
      %v1115 = vpop.f32.mrf.mxu0
      %1116 = vdwg.mxu0
      %v1117 = vmax.f32 %v1088, 0.0
      %v1118 = vmax.f32 %v1114, 0.0
      %v1119 = vadd.f32 %v1117, %v959
      %v1120 = vadd.f32 %v1118, %v960
      %v1121 = vpack.c.bf16 %v1119, %v1119
      %v1122 = vpack.c.bf16 %v1120, %v1120
      %v1123 = vld [vmem:[%s723] sm:$0xff]
      %v1124 = vld [vmem:[%s723 + $0x8] sm:$0xff]
      %v1125 = vld [vmem:[%s723 + $0x10] sm:$0xff]
      %v1126 = vld [vmem:[%s723 + $0x18] sm:$0xff]
      %v1127 = vld [vmem:[%s723 + $0x20] sm:$0xff]
      %v1128 = vld [vmem:[%s723 + $0x28] sm:$0xff]
      %v1129 = vld [vmem:[%s723 + $0x30] sm:$0xff]
      %v1130 = vld [vmem:[%s723 + $0x38] sm:$0xff]
      %v1131 = vld [vmem:[%s723 + $0x40] sm:$0xff]
      %v1132 = vld [vmem:[%s723 + $0x48] sm:$0xff]
      %v1133 = vld [vmem:[%s723 + $0x50] sm:$0xff]
      %v1134 = vld [vmem:[%s723 + $0x58] sm:$0xff]
      %v1135 = vld [vmem:[%s723 + $0x60] sm:$0xff]
      %v1136 = vld [vmem:[%s723 + $0x68] sm:$0xff]
      %v1137 = vld [vmem:[%s723 + $0x70] sm:$0xff]
      %v1138 = vld [vmem:[%s723 + $0x78] sm:$0xff]
      %v1139 = vld [vmem:[%s723 + $0x80] sm:$0xff]
      %v1140 = vld [vmem:[%s723 + $0x88] sm:$0xff]
      %v1141 = vld [vmem:[%s723 + $0x90] sm:$0xff]
      %v1142 = vld [vmem:[%s723 + $0x98] sm:$0xff]
      %v1143 = vld [vmem:[%s723 + $0xa0] sm:$0xff]
      %v1144 = vld [vmem:[%s723 + $0xa8] sm:$0xff]
      %v1145 = vld [vmem:[%s723 + $0xb0] sm:$0xff]
      %v1146 = vld [vmem:[%s723 + $0xb8] sm:$0xff]
      %v1147 = vld [vmem:[%s723 + $0xc0] sm:$0xff]
      %v1148 = vld [vmem:[%s723 + $0xc8] sm:$0xff]
      %v1149 = vld [vmem:[%s723 + $0xd0] sm:$0xff]
      %v1150 = vld [vmem:[%s723 + $0xd8] sm:$0xff]
      %v1151 = vld [vmem:[%s723 + $0xe0] sm:$0xff]
      %v1152 = vld [vmem:[%s723 + $0xe8] sm:$0xff]
      %v1153 = vld [vmem:[%s723 + $0xf0] sm:$0xff]
      %v1154 = vld [vmem:[%s723 + $0xf8] sm:$0xff]
      %v1155 = vld [vmem:[%s723 + $0x100] sm:$0xff]
      %v1156 = vld [vmem:[%s723 + $0x108] sm:$0xff]
      %v1157 = vld [vmem:[%s723 + $0x110] sm:$0xff]
      %v1158 = vld [vmem:[%s723 + $0x118] sm:$0xff]
      %v1159 = vld [vmem:[%s723 + $0x120] sm:$0xff]
      %v1160 = vld [vmem:[%s723 + $0x128] sm:$0xff]
      %v1161 = vld [vmem:[%s723 + $0x130] sm:$0xff]
      %v1162 = vld [vmem:[%s723 + $0x138] sm:$0xff]
      %v1163 = vld [vmem:[%s723 + $0x140] sm:$0xff]
      %v1164 = vld [vmem:[%s723 + $0x148] sm:$0xff]
      %v1165 = vld [vmem:[%s723 + $0x150] sm:$0xff]
      %v1166 = vld [vmem:[%s723 + $0x158] sm:$0xff]
      %v1167 = vld [vmem:[%s723 + $0x160] sm:$0xff]
      %v1168 = vld [vmem:[%s723 + $0x168] sm:$0xff]
      %v1169 = vld [vmem:[%s723 + $0x170] sm:$0xff]
      %v1170 = vld [vmem:[%s723 + $0x178] sm:$0xff]
      %v1171 = vld [vmem:[%s723 + $0x180] sm:$0xff]
      %v1172 = vld [vmem:[%s723 + $0x188] sm:$0xff]
      %v1173 = vld [vmem:[%s723 + $0x190] sm:$0xff]
      %v1174 = vld [vmem:[%s723 + $0x198] sm:$0xff]
      %v1175 = vld [vmem:[%s723 + $0x1a0] sm:$0xff]
      %v1176 = vld [vmem:[%s723 + $0x1a8] sm:$0xff]
      %v1177 = vld [vmem:[%s723 + $0x1b0] sm:$0xff]
      %v1178 = vld [vmem:[%s723 + $0x1b8] sm:$0xff]
      %v1179 = vld [vmem:[%s723 + $0x1c0] sm:$0xff]
      %v1180 = vld [vmem:[%s723 + $0x1c8] sm:$0xff]
      %v1181 = vld [vmem:[%s723 + $0x1d0] sm:$0xff]
      %v1182 = vld [vmem:[%s723 + $0x1d8] sm:$0xff]
      %v1183 = vld [vmem:[%s723 + $0x1e0] sm:$0xff]
      %v1184 = vld [vmem:[%s723 + $0x1e8] sm:$0xff]
      %v1185 = vld [vmem:[%s723 + $0x1f0] sm:$0xff]
      %v1186 = vld [vmem:[%s723 + $0x1f8] sm:$0xff]
      %v1187 = vld [vmem:[%s723 + $0x200] sm:$0xff]
      %v1188 = vld [vmem:[%s723 + $0x208] sm:$0xff]
      %v1189 = vld [vmem:[%s723 + $0x210] sm:$0xff]
      %v1190 = vld [vmem:[%s723 + $0x218] sm:$0xff]
      %v1191 = vld [vmem:[%s723 + $0x220] sm:$0xff]
      %v1192 = vld [vmem:[%s723 + $0x228] sm:$0xff]
      %v1193 = vld [vmem:[%s723 + $0x230] sm:$0xff]
      %v1194 = vld [vmem:[%s723 + $0x238] sm:$0xff]
      %v1195 = vld [vmem:[%s723 + $0x240] sm:$0xff]
      %v1196 = vld [vmem:[%s723 + $0x248] sm:$0xff]
      %v1197 = vld [vmem:[%s723 + $0x250] sm:$0xff]
      %v1198 = vld [vmem:[%s723 + $0x258] sm:$0xff]
      %v1199 = vld [vmem:[%s723 + $0x260] sm:$0xff]
      %v1200 = vld [vmem:[%s723 + $0x268] sm:$0xff]
      %v1201 = vld [vmem:[%s723 + $0x270] sm:$0xff]
      %v1202 = vld [vmem:[%s723 + $0x278] sm:$0xff]
      %v1203 = vld [vmem:[%s723 + $0x280] sm:$0xff]
      %v1204 = vld [vmem:[%s723 + $0x288] sm:$0xff]
      %v1205 = vld [vmem:[%s723 + $0x290] sm:$0xff]
      %v1206 = vld [vmem:[%s723 + $0x298] sm:$0xff]
      %v1207 = vld [vmem:[%s723 + $0x2a0] sm:$0xff]
      %v1208 = vld [vmem:[%s723 + $0x2a8] sm:$0xff]
      %v1209 = vld [vmem:[%s723 + $0x2b0] sm:$0xff]
      %v1210 = vld [vmem:[%s723 + $0x2b8] sm:$0xff]
      %v1211 = vld [vmem:[%s723 + $0x2c0] sm:$0xff]
      %v1212 = vld [vmem:[%s723 + $0x2c8] sm:$0xff]
      %v1213 = vld [vmem:[%s723 + $0x2d0] sm:$0xff]
      %v1214 = vld [vmem:[%s723 + $0x2d8] sm:$0xff]
      %v1215 = vld [vmem:[%s723 + $0x2e0] sm:$0xff]
      %v1216 = vld [vmem:[%s723 + $0x2e8] sm:$0xff]
      %v1217 = vld [vmem:[%s723 + $0x2f0] sm:$0xff]
      %v1218 = vld [vmem:[%s723 + $0x2f8] sm:$0xff]
      %v1219 = vld [vmem:[%s723 + $0x300] sm:$0xff]
      %v1220 = vld [vmem:[%s723 + $0x308] sm:$0xff]
      %v1221 = vld [vmem:[%s723 + $0x310] sm:$0xff]
      %v1222 = vld [vmem:[%s723 + $0x318] sm:$0xff]
      %v1223 = vld [vmem:[%s723 + $0x320] sm:$0xff]
      %v1224 = vld [vmem:[%s723 + $0x328] sm:$0xff]
      %v1225 = vld [vmem:[%s723 + $0x330] sm:$0xff]
      %v1226 = vld [vmem:[%s723 + $0x338] sm:$0xff]
      %v1227 = vld [vmem:[%s723 + $0x340] sm:$0xff]
      %v1228 = vld [vmem:[%s723 + $0x348] sm:$0xff]
      %v1229 = vld [vmem:[%s723 + $0x350] sm:$0xff]
      %v1230 = vld [vmem:[%s723 + $0x358] sm:$0xff]
      %v1231 = vld [vmem:[%s723 + $0x360] sm:$0xff]
      %v1232 = vld [vmem:[%s723 + $0x368] sm:$0xff]
      %v1233 = vld [vmem:[%s723 + $0x370] sm:$0xff]
      %v1234 = vld [vmem:[%s723 + $0x378] sm:$0xff]
      %v1235 = vld [vmem:[%s723 + $0x380] sm:$0xff]
      %v1236 = vld [vmem:[%s723 + $0x388] sm:$0xff]
      %v1237 = vld [vmem:[%s723 + $0x390] sm:$0xff]
      %v1238 = vld [vmem:[%s723 + $0x398] sm:$0xff]
      %v1239 = vld [vmem:[%s723 + $0x3a0] sm:$0xff]
      %v1240 = vld [vmem:[%s723 + $0x3a8] sm:$0xff]
      %v1241 = vld [vmem:[%s723 + $0x3b0] sm:$0xff]
      %v1242 = vld [vmem:[%s723 + $0x3b8] sm:$0xff]
      %v1243 = vld [vmem:[%s723 + $0x3c0] sm:$0xff]
      %v1244 = vld [vmem:[%s723 + $0x3c8] sm:$0xff]
      %v1245 = vld [vmem:[%s723 + $0x3d0] sm:$0xff]
      %v1246 = vld [vmem:[%s723 + $0x3d8] sm:$0xff]
      %v1247 = vld [vmem:[%s723 + $0x3e0] sm:$0xff]
      %v1248 = vld [vmem:[%s723 + $0x3e8] sm:$0xff]
      %v1249 = vld [vmem:[%s723 + $0x3f0] sm:$0xff]
      %v1250 = vld [vmem:[%s723 + $0x3f8] sm:$0xff]
      %v1251 = vld [vmem:[%s723 + $0x400] sm:$0xff]
      %v1252 = vld [vmem:[%s723 + $0x408] sm:$0xff]
      %v1253 = vld [vmem:[%s723 + $0x410] sm:$0xff]
      %v1254 = vld [vmem:[%s723 + $0x418] sm:$0xff]
      %v1255 = vld [vmem:[%s723 + $0x420] sm:$0xff]
      %v1256 = vld [vmem:[%s723 + $0x428] sm:$0xff]
      %v1257 = vld [vmem:[%s723 + $0x430] sm:$0xff]
      %v1258 = vld [vmem:[%s723 + $0x438] sm:$0xff]
      %v1259 = vld [vmem:[%s723 + $0x440] sm:$0xff]
      %v1260 = vld [vmem:[%s723 + $0x448] sm:$0xff]
      %v1261 = vld [vmem:[%s723 + $0x450] sm:$0xff]
      %v1262 = vld [vmem:[%s723 + $0x458] sm:$0xff]
      %v1263 = vld [vmem:[%s723 + $0x460] sm:$0xff]
      %v1264 = vld [vmem:[%s723 + $0x468] sm:$0xff]
      %v1265 = vld [vmem:[%s723 + $0x470] sm:$0xff]
      %v1266 = vld [vmem:[%s723 + $0x478] sm:$0xff]
      %v1267 = vld [vmem:[%s723 + $0x480] sm:$0xff]
      %v1268 = vld [vmem:[%s723 + $0x488] sm:$0xff]
      %v1269 = vld [vmem:[%s723 + $0x490] sm:$0xff]
      %v1270 = vld [vmem:[%s723 + $0x498] sm:$0xff]
      %v1271 = vld [vmem:[%s723 + $0x4a0] sm:$0xff]
      %v1272 = vld [vmem:[%s723 + $0x4a8] sm:$0xff]
      %v1273 = vld [vmem:[%s723 + $0x4b0] sm:$0xff]
      %v1274 = vld [vmem:[%s723 + $0x4b8] sm:$0xff]
      %v1275 = vld [vmem:[%s723 + $0x4c0] sm:$0xff]
      %v1276 = vld [vmem:[%s723 + $0x4c8] sm:$0xff]
      %v1277 = vld [vmem:[%s723 + $0x4d0] sm:$0xff]
      %v1278 = vld [vmem:[%s723 + $0x4d8] sm:$0xff]
      %v1279 = vld [vmem:[%s723 + $0x4e0] sm:$0xff]
      %v1280 = vld [vmem:[%s723 + $0x4e8] sm:$0xff]
      %v1281 = vld [vmem:[%s723 + $0x4f0] sm:$0xff]
      %v1282 = vld [vmem:[%s723 + $0x4f8] sm:$0xff]
      %v1283 = vld [vmem:[%s723 + $0x500] sm:$0xff]
      %v1284 = vld [vmem:[%s723 + $0x508] sm:$0xff]
      %v1285 = vld [vmem:[%s723 + $0x510] sm:$0xff]
      %v1286 = vld [vmem:[%s723 + $0x518] sm:$0xff]
      %v1287 = vld [vmem:[%s723 + $0x520] sm:$0xff]
      %v1288 = vld [vmem:[%s723 + $0x528] sm:$0xff]
      %v1289 = vld [vmem:[%s723 + $0x530] sm:$0xff]
      %v1290 = vld [vmem:[%s723 + $0x538] sm:$0xff]
      %v1291 = vld [vmem:[%s723 + $0x540] sm:$0xff]
      %v1292 = vld [vmem:[%s723 + $0x548] sm:$0xff]
      %v1293 = vld [vmem:[%s723 + $0x550] sm:$0xff]
      %v1294 = vld [vmem:[%s723 + $0x558] sm:$0xff]
      %v1295 = vld [vmem:[%s723 + $0x560] sm:$0xff]
      %v1296 = vld [vmem:[%s723 + $0x568] sm:$0xff]
      %v1297 = vld [vmem:[%s723 + $0x570] sm:$0xff]
      %v1298 = vld [vmem:[%s723 + $0x578] sm:$0xff]
      %v1299 = vld [vmem:[%s723 + $0x580] sm:$0xff]
      %v1300 = vld [vmem:[%s723 + $0x588] sm:$0xff]
      %v1301 = vld [vmem:[%s723 + $0x590] sm:$0xff]
      %v1302 = vld [vmem:[%s723 + $0x598] sm:$0xff]
      %v1303 = vld [vmem:[%s723 + $0x5a0] sm:$0xff]
      %v1304 = vld [vmem:[%s723 + $0x5a8] sm:$0xff]
      %v1305 = vld [vmem:[%s723 + $0x5b0] sm:$0xff]
      %v1306 = vld [vmem:[%s723 + $0x5b8] sm:$0xff]
      %v1307 = vld [vmem:[%s723 + $0x5c0] sm:$0xff]
      %v1308 = vld [vmem:[%s723 + $0x5c8] sm:$0xff]
      %v1309 = vld [vmem:[%s723 + $0x5d0] sm:$0xff]
      %v1310 = vld [vmem:[%s723 + $0x5d8] sm:$0xff]
      %v1311 = vld [vmem:[%s723 + $0x5e0] sm:$0xff]
      %v1312 = vld [vmem:[%s723 + $0x5e8] sm:$0xff]
      %v1313 = vld [vmem:[%s723 + $0x5f0] sm:$0xff]
      %v1314 = vld [vmem:[%s723 + $0x5f8] sm:$0xff]
      %v1315 = vld [vmem:[%s723 + $0x600] sm:$0xff]
      %v1316 = vld [vmem:[%s723 + $0x608] sm:$0xff]
      %v1317 = vld [vmem:[%s723 + $0x610] sm:$0xff]
      %v1318 = vld [vmem:[%s723 + $0x618] sm:$0xff]
      %v1319 = vld [vmem:[%s723 + $0x620] sm:$0xff]
      %v1320 = vld [vmem:[%s723 + $0x628] sm:$0xff]
      %v1321 = vld [vmem:[%s723 + $0x630] sm:$0xff]
      %v1322 = vld [vmem:[%s723 + $0x638] sm:$0xff]
      %v1323 = vld [vmem:[%s723 + $0x640] sm:$0xff]
      %v1324 = vld [vmem:[%s723 + $0x648] sm:$0xff]
      %v1325 = vld [vmem:[%s723 + $0x650] sm:$0xff]
      %v1326 = vld [vmem:[%s723 + $0x658] sm:$0xff]
      %v1327 = vld [vmem:[%s723 + $0x660] sm:$0xff]
      %v1328 = vld [vmem:[%s723 + $0x668] sm:$0xff]
      %v1329 = vld [vmem:[%s723 + $0x670] sm:$0xff]
      %v1330 = vld [vmem:[%s723 + $0x678] sm:$0xff]
      %v1331 = vld [vmem:[%s723 + $0x680] sm:$0xff]
      %v1332 = vld [vmem:[%s723 + $0x688] sm:$0xff]
      %v1333 = vld [vmem:[%s723 + $0x690] sm:$0xff]
      %v1334 = vld [vmem:[%s723 + $0x698] sm:$0xff]
      %v1335 = vld [vmem:[%s723 + $0x6a0] sm:$0xff]
      %v1336 = vld [vmem:[%s723 + $0x6a8] sm:$0xff]
      %v1337 = vld [vmem:[%s723 + $0x6b0] sm:$0xff]
      %v1338 = vld [vmem:[%s723 + $0x6b8] sm:$0xff]
      %v1339 = vld [vmem:[%s723 + $0x6c0] sm:$0xff]
      %v1340 = vld [vmem:[%s723 + $0x6c8] sm:$0xff]
      %v1341 = vld [vmem:[%s723 + $0x6d0] sm:$0xff]
      %v1342 = vld [vmem:[%s723 + $0x6d8] sm:$0xff]
      %v1343 = vld [vmem:[%s723 + $0x6e0] sm:$0xff]
      %v1344 = vld [vmem:[%s723 + $0x6e8] sm:$0xff]
      %v1345 = vld [vmem:[%s723 + $0x6f0] sm:$0xff]
      %v1346 = vld [vmem:[%s723 + $0x6f8] sm:$0xff]
      %v1347 = vld [vmem:[%s723 + $0x700] sm:$0xff]
      %v1348 = vld [vmem:[%s723 + $0x708] sm:$0xff]
      %v1349 = vld [vmem:[%s723 + $0x710] sm:$0xff]
      %v1350 = vld [vmem:[%s723 + $0x718] sm:$0xff]
      %v1351 = vld [vmem:[%s723 + $0x720] sm:$0xff]
      %v1352 = vld [vmem:[%s723 + $0x728] sm:$0xff]
      %v1353 = vld [vmem:[%s723 + $0x730] sm:$0xff]
      %v1354 = vld [vmem:[%s723 + $0x738] sm:$0xff]
      %v1355 = vld [vmem:[%s723 + $0x740] sm:$0xff]
      %v1356 = vld [vmem:[%s723 + $0x748] sm:$0xff]
      %v1357 = vld [vmem:[%s723 + $0x750] sm:$0xff]
      %v1358 = vld [vmem:[%s723 + $0x758] sm:$0xff]
      %v1359 = vld [vmem:[%s723 + $0x760] sm:$0xff]
      %v1360 = vld [vmem:[%s723 + $0x768] sm:$0xff]
      %v1361 = vld [vmem:[%s723 + $0x770] sm:$0xff]
      %v1362 = vld [vmem:[%s723 + $0x778] sm:$0xff]
      %v1363 = vld [vmem:[%s723 + $0x780] sm:$0xff]
      %v1364 = vld [vmem:[%s723 + $0x788] sm:$0xff]
      %v1365 = vld [vmem:[%s723 + $0x790] sm:$0xff]
      %v1366 = vld [vmem:[%s723 + $0x798] sm:$0xff]
      %v1367 = vld [vmem:[%s723 + $0x7a0] sm:$0xff]
      %v1368 = vld [vmem:[%s723 + $0x7a8] sm:$0xff]
      %v1369 = vld [vmem:[%s723 + $0x7b0] sm:$0xff]
      %v1370 = vld [vmem:[%s723 + $0x7b8] sm:$0xff]
      %v1371 = vld [vmem:[%s723 + $0x7c0] sm:$0xff]
      %v1372 = vld [vmem:[%s723 + $0x7c8] sm:$0xff]
      %v1373 = vld [vmem:[%s723 + $0x7d0] sm:$0xff]
      %v1374 = vld [vmem:[%s723 + $0x7d8] sm:$0xff]
      %v1375 = vld [vmem:[%s723 + $0x7e0] sm:$0xff]
      %v1376 = vld [vmem:[%s723 + $0x7e8] sm:$0xff]
      %v1377 = vld [vmem:[%s723 + $0x7f0] sm:$0xff]
      %v1378 = vld [vmem:[%s723 + $0x7f8] sm:$0xff]
      %v1379 = vpack.c.bf16 %v1131, %v1123
      %v1380 = vpack.c.bf16 %v1132, %v1124
      %v1381 = vpack.c.bf16 %v1133, %v1125
      %v1382 = vpack.c.bf16 %v1134, %v1126
      %v1383 = vpack.c.bf16 %v1135, %v1127
      %v1384 = vpack.c.bf16 %v1136, %v1128
      %v1385 = vpack.c.bf16 %v1137, %v1129
      %v1386 = vpack.c.bf16 %v1138, %v1130
      %v1387 = vpack.c.bf16 %v1147, %v1139
      %v1388 = vpack.c.bf16 %v1148, %v1140
      %v1389 = vpack.c.bf16 %v1149, %v1141
      %v1390 = vpack.c.bf16 %v1150, %v1142
      %v1391 = vpack.c.bf16 %v1151, %v1143
      %v1392 = vpack.c.bf16 %v1152, %v1144
      %v1393 = vpack.c.bf16 %v1153, %v1145
      %v1394 = vpack.c.bf16 %v1154, %v1146
      %v1395 = vpack.c.bf16 %v1163, %v1155
      %v1396 = vpack.c.bf16 %v1164, %v1156
      %v1397 = vpack.c.bf16 %v1165, %v1157
      %v1398 = vpack.c.bf16 %v1166, %v1158
      %v1399 = vpack.c.bf16 %v1167, %v1159
      %v1400 = vpack.c.bf16 %v1168, %v1160
      %v1401 = vpack.c.bf16 %v1169, %v1161
      %v1402 = vpack.c.bf16 %v1170, %v1162
      %v1403 = vpack.c.bf16 %v1179, %v1171
      %v1404 = vpack.c.bf16 %v1180, %v1172
      %v1405 = vpack.c.bf16 %v1181, %v1173
      %v1406 = vpack.c.bf16 %v1182, %v1174
      %v1407 = vpack.c.bf16 %v1183, %v1175
      %v1408 = vpack.c.bf16 %v1184, %v1176
      %v1409 = vpack.c.bf16 %v1185, %v1177
      %v1410 = vpack.c.bf16 %v1186, %v1178
      %v1411 = vpack.c.bf16 %v1195, %v1187
      %v1412 = vpack.c.bf16 %v1196, %v1188
      %v1413 = vpack.c.bf16 %v1197, %v1189
      %v1414 = vpack.c.bf16 %v1198, %v1190
      %v1415 = vpack.c.bf16 %v1199, %v1191
      %v1416 = vpack.c.bf16 %v1200, %v1192
      %v1417 = vpack.c.bf16 %v1201, %v1193
      %v1418 = vpack.c.bf16 %v1202, %v1194
      %v1419 = vpack.c.bf16 %v1211, %v1203
      %v1420 = vpack.c.bf16 %v1212, %v1204
      %v1421 = vpack.c.bf16 %v1213, %v1205
      %v1422 = vpack.c.bf16 %v1214, %v1206
      %v1423 = vpack.c.bf16 %v1215, %v1207
      %v1424 = vpack.c.bf16 %v1216, %v1208
      %v1425 = vpack.c.bf16 %v1217, %v1209
      %v1426 = vpack.c.bf16 %v1218, %v1210
      %v1427 = vpack.c.bf16 %v1227, %v1219
      %v1428 = vpack.c.bf16 %v1228, %v1220
      %v1429 = vpack.c.bf16 %v1229, %v1221
      %v1430 = vpack.c.bf16 %v1230, %v1222
      %v1431 = vpack.c.bf16 %v1231, %v1223
      %v1432 = vpack.c.bf16 %v1232, %v1224
      %v1433 = vpack.c.bf16 %v1233, %v1225
      %v1434 = vpack.c.bf16 %v1234, %v1226
      %v1435 = vpack.c.bf16 %v1243, %v1235
      %v1436 = vpack.c.bf16 %v1244, %v1236
      %v1437 = vpack.c.bf16 %v1245, %v1237
      %v1438 = vpack.c.bf16 %v1246, %v1238
      %v1439 = vpack.c.bf16 %v1247, %v1239
      %v1440 = vpack.c.bf16 %v1248, %v1240
      %v1441 = vpack.c.bf16 %v1249, %v1241
      %v1442 = vpack.c.bf16 %v1250, %v1242
      %v1443 = vpack.c.bf16 %v1259, %v1251
      %v1444 = vpack.c.bf16 %v1260, %v1252
      %v1445 = vpack.c.bf16 %v1261, %v1253
      %v1446 = vpack.c.bf16 %v1262, %v1254
      %v1447 = vpack.c.bf16 %v1263, %v1255
      %v1448 = vpack.c.bf16 %v1264, %v1256
      %v1449 = vpack.c.bf16 %v1265, %v1257
      %v1450 = vpack.c.bf16 %v1266, %v1258
      %v1451 = vpack.c.bf16 %v1275, %v1267
      %v1452 = vpack.c.bf16 %v1276, %v1268
      %v1453 = vpack.c.bf16 %v1277, %v1269
      %v1454 = vpack.c.bf16 %v1278, %v1270
      %v1455 = vpack.c.bf16 %v1279, %v1271
      %v1456 = vpack.c.bf16 %v1280, %v1272
      %v1457 = vpack.c.bf16 %v1281, %v1273
      %v1458 = vpack.c.bf16 %v1282, %v1274
      %v1459 = vpack.c.bf16 %v1291, %v1283
      %v1460 = vpack.c.bf16 %v1292, %v1284
      %v1461 = vpack.c.bf16 %v1293, %v1285
      %v1462 = vpack.c.bf16 %v1294, %v1286
      %v1463 = vpack.c.bf16 %v1295, %v1287
      %v1464 = vpack.c.bf16 %v1296, %v1288
      %v1465 = vpack.c.bf16 %v1297, %v1289
      %v1466 = vpack.c.bf16 %v1298, %v1290
      %v1467 = vpack.c.bf16 %v1307, %v1299
      %v1468 = vpack.c.bf16 %v1308, %v1300
      %v1469 = vpack.c.bf16 %v1309, %v1301
      %v1470 = vpack.c.bf16 %v1310, %v1302
      %v1471 = vpack.c.bf16 %v1311, %v1303
      %v1472 = vpack.c.bf16 %v1312, %v1304
      %v1473 = vpack.c.bf16 %v1313, %v1305
      %v1474 = vpack.c.bf16 %v1314, %v1306
      %v1475 = vpack.c.bf16 %v1323, %v1315
      %v1476 = vpack.c.bf16 %v1324, %v1316
      %v1477 = vpack.c.bf16 %v1325, %v1317
      %v1478 = vpack.c.bf16 %v1326, %v1318
      %v1479 = vpack.c.bf16 %v1327, %v1319
      %v1480 = vpack.c.bf16 %v1328, %v1320
      %v1481 = vpack.c.bf16 %v1329, %v1321
      %v1482 = vpack.c.bf16 %v1330, %v1322
      %v1483 = vpack.c.bf16 %v1339, %v1331
      %v1484 = vpack.c.bf16 %v1340, %v1332
      %v1485 = vpack.c.bf16 %v1341, %v1333
      %v1486 = vpack.c.bf16 %v1342, %v1334
      %v1487 = vpack.c.bf16 %v1343, %v1335
      %v1488 = vpack.c.bf16 %v1344, %v1336
      %v1489 = vpack.c.bf16 %v1345, %v1337
      %v1490 = vpack.c.bf16 %v1346, %v1338
      %v1491 = vpack.c.bf16 %v1355, %v1347
      %v1492 = vpack.c.bf16 %v1356, %v1348
      %v1493 = vpack.c.bf16 %v1357, %v1349
      %v1494 = vpack.c.bf16 %v1358, %v1350
      %v1495 = vpack.c.bf16 %v1359, %v1351
      %v1496 = vpack.c.bf16 %v1360, %v1352
      %v1497 = vpack.c.bf16 %v1361, %v1353
      %v1498 = vpack.c.bf16 %v1362, %v1354
      %v1499 = vpack.c.bf16 %v1371, %v1363
      %v1500 = vpack.c.bf16 %v1372, %v1364
      %v1501 = vpack.c.bf16 %v1373, %v1365
      %v1502 = vpack.c.bf16 %v1374, %v1366
      %v1503 = vpack.c.bf16 %v1375, %v1367
      %v1504 = vpack.c.bf16 %v1376, %v1368
      %v1505 = vpack.c.bf16 %v1377, %v1369
      %v1506 = vpack.c.bf16 %v1378, %v1370
      %v1507 = vld [vmem:[%s727] sm:$0xff]
      %v1509 = vperm.slane %v1507, 0
      %v1510 = vperm.slane %v1507, 1
      %v1511 = vperm.slane %v1507, 2
      %v1512 = vperm.slane %v1507, 3
      %v1513 = vperm.slane %v1507, 4
      %v1514 = vperm.slane %v1507, 5
      %v1515 = vperm.slane %v1507, 6
      %v1516 = vperm.slane %v1507, 7
      %1525 = vmatpush.bf16.msra.mxu0 %v1435
      %1526 = vmatpush.bf16.msra.mxu0 %v1427
      %1527 = vmatpush.bf16.msra.mxu0 %v1419
      %1528 = vmatpush.bf16.msra.mxu0 %v1411
      %1529 = vmatpush.bf16.msra.mxu0 %v1403
      %1530 = vmatpush.bf16.msra.mxu0 %v1395
      %1531 = vmatpush.bf16.msra.mxu0 %v1387
      %1532 = vmatpush.bf16.msra.mxu0 %v1379
      %1533 = vmatmul.bf16.gmra.mxu0 %v1121
      %v1534 = vpop.f32.mrf.mxu0
      %v1535 = vadd.f32 %v1509, %v1534
      %v1536 = vpop.f32.mrf.mxu0
      %1537 = vdwg.mxu0
      %1538 = vmatpush.bf16.msra.mxu0 %v1499
      %1539 = vmatpush.bf16.msra.mxu0 %v1491
      %1540 = vmatpush.bf16.msra.mxu0 %v1483
      %1541 = vmatpush.bf16.msra.mxu0 %v1475
      %1542 = vmatpush.bf16.msra.mxu0 %v1467
      %1543 = vmatpush.bf16.msra.mxu0 %v1459
      %1544 = vmatpush.bf16.msra.mxu0 %v1451
      %1545 = vmatpush.bf16.msra.mxu0 %v1443
      %1546 = vmatmul.bf16.gmra.mxu0 %v1122
      %v1547 = vpop.f32.mrf.mxu0
      %v1548 = vadd.f32 %v1535, %v1547
      %v1549 = vpop.f32.mrf.mxu0
      %1550 = vdwg.mxu0
      %1551 = vmatpush.bf16.msra.mxu0 %v1436
      %1552 = vmatpush.bf16.msra.mxu0 %v1428
      %1553 = vmatpush.bf16.msra.mxu0 %v1420
      %1554 = vmatpush.bf16.msra.mxu0 %v1412
      %1555 = vmatpush.bf16.msra.mxu0 %v1404
      %1556 = vmatpush.bf16.msra.mxu0 %v1396
      %1557 = vmatpush.bf16.msra.mxu0 %v1388
      %1558 = vmatpush.bf16.msra.mxu0 %v1380
      %1559 = vmatmul.bf16.gmra.mxu0 %v1121
      %v1560 = vpop.f32.mrf.mxu0
      %v1561 = vadd.f32 %v1510, %v1560
      %v1562 = vpop.f32.mrf.mxu0
      %1563 = vdwg.mxu0
      %1564 = vmatpush.bf16.msra.mxu0 %v1500
      %1565 = vmatpush.bf16.msra.mxu0 %v1492
      %1566 = vmatpush.bf16.msra.mxu0 %v1484
      %1567 = vmatpush.bf16.msra.mxu0 %v1476
      %1568 = vmatpush.bf16.msra.mxu0 %v1468
      %1569 = vmatpush.bf16.msra.mxu0 %v1460
      %1570 = vmatpush.bf16.msra.mxu0 %v1452
      %1571 = vmatpush.bf16.msra.mxu0 %v1444
      %1572 = vmatmul.bf16.gmra.mxu0 %v1122
      %v1573 = vpop.f32.mrf.mxu0
      %v1574 = vadd.f32 %v1561, %v1573
      %v1575 = vpop.f32.mrf.mxu0
      %1576 = vdwg.mxu0
      %1577 = vmatpush.bf16.msra.mxu0 %v1437
      %1578 = vmatpush.bf16.msra.mxu0 %v1429
      %1579 = vmatpush.bf16.msra.mxu0 %v1421
      %1580 = vmatpush.bf16.msra.mxu0 %v1413
      %1581 = vmatpush.bf16.msra.mxu0 %v1405
      %1582 = vmatpush.bf16.msra.mxu0 %v1397
      %1583 = vmatpush.bf16.msra.mxu0 %v1389
      %1584 = vmatpush.bf16.msra.mxu0 %v1381
      %1585 = vmatmul.bf16.gmra.mxu0 %v1121
      %v1586 = vpop.f32.mrf.mxu0
      %v1587 = vadd.f32 %v1511, %v1586
      %v1588 = vpop.f32.mrf.mxu0
      %1589 = vdwg.mxu0
      %1590 = vmatpush.bf16.msra.mxu0 %v1501
      %1591 = vmatpush.bf16.msra.mxu0 %v1493
      %1592 = vmatpush.bf16.msra.mxu0 %v1485
      %1593 = vmatpush.bf16.msra.mxu0 %v1477
      %1594 = vmatpush.bf16.msra.mxu0 %v1469
      %1595 = vmatpush.bf16.msra.mxu0 %v1461
      %1596 = vmatpush.bf16.msra.mxu0 %v1453
      %1597 = vmatpush.bf16.msra.mxu0 %v1445
      %1598 = vmatmul.bf16.gmra.mxu0 %v1122
      %v1599 = vpop.f32.mrf.mxu0
      %v1600 = vadd.f32 %v1587, %v1599
      %v1601 = vpop.f32.mrf.mxu0
      %1602 = vdwg.mxu0
      %1603 = vmatpush.bf16.msra.mxu0 %v1438
      %1604 = vmatpush.bf16.msra.mxu0 %v1430
      %1605 = vmatpush.bf16.msra.mxu0 %v1422
      %1606 = vmatpush.bf16.msra.mxu0 %v1414
      %1607 = vmatpush.bf16.msra.mxu0 %v1406
      %1608 = vmatpush.bf16.msra.mxu0 %v1398
      %1609 = vmatpush.bf16.msra.mxu0 %v1390
      %1610 = vmatpush.bf16.msra.mxu0 %v1382
      %1611 = vmatmul.bf16.gmra.mxu0 %v1121
      %v1612 = vpop.f32.mrf.mxu0
      %v1613 = vadd.f32 %v1512, %v1612
      %v1614 = vpop.f32.mrf.mxu0
      %1615 = vdwg.mxu0
      %1616 = vmatpush.bf16.msra.mxu0 %v1502
      %1617 = vmatpush.bf16.msra.mxu0 %v1494
      %1618 = vmatpush.bf16.msra.mxu0 %v1486
      %1619 = vmatpush.bf16.msra.mxu0 %v1478
      %1620 = vmatpush.bf16.msra.mxu0 %v1470
      %1621 = vmatpush.bf16.msra.mxu0 %v1462
      %1622 = vmatpush.bf16.msra.mxu0 %v1454
      %1623 = vmatpush.bf16.msra.mxu0 %v1446
      %1624 = vmatmul.bf16.gmra.mxu0 %v1122
      %v1625 = vpop.f32.mrf.mxu0
      %v1626 = vadd.f32 %v1613, %v1625
      %v1627 = vpop.f32.mrf.mxu0
      %1628 = vdwg.mxu0
      %1629 = vmatpush.bf16.msra.mxu0 %v1439
      %1630 = vmatpush.bf16.msra.mxu0 %v1431
      %1631 = vmatpush.bf16.msra.mxu0 %v1423
      %1632 = vmatpush.bf16.msra.mxu0 %v1415
      %1633 = vmatpush.bf16.msra.mxu0 %v1407
      %1634 = vmatpush.bf16.msra.mxu0 %v1399
      %1635 = vmatpush.bf16.msra.mxu0 %v1391
      %1636 = vmatpush.bf16.msra.mxu0 %v1383
      %1637 = vmatmul.bf16.gmra.mxu0 %v1121
      %v1638 = vpop.f32.mrf.mxu0
      %v1639 = vadd.f32 %v1513, %v1638
      %v1640 = vpop.f32.mrf.mxu0
      %1641 = vdwg.mxu0
      %1642 = vmatpush.bf16.msra.mxu0 %v1503
      %1643 = vmatpush.bf16.msra.mxu0 %v1495
      %1644 = vmatpush.bf16.msra.mxu0 %v1487
      %1645 = vmatpush.bf16.msra.mxu0 %v1479
      %1646 = vmatpush.bf16.msra.mxu0 %v1471
      %1647 = vmatpush.bf16.msra.mxu0 %v1463
      %1648 = vmatpush.bf16.msra.mxu0 %v1455
      %1649 = vmatpush.bf16.msra.mxu0 %v1447
      %1650 = vmatmul.bf16.gmra.mxu0 %v1122
      %v1651 = vpop.f32.mrf.mxu0
      %v1652 = vadd.f32 %v1639, %v1651
      %v1653 = vpop.f32.mrf.mxu0
      %1654 = vdwg.mxu0
      %1655 = vmatpush.bf16.msra.mxu0 %v1440
      %1656 = vmatpush.bf16.msra.mxu0 %v1432
      %1657 = vmatpush.bf16.msra.mxu0 %v1424
      %1658 = vmatpush.bf16.msra.mxu0 %v1416
      %1659 = vmatpush.bf16.msra.mxu0 %v1408
      %1660 = vmatpush.bf16.msra.mxu0 %v1400
      %1661 = vmatpush.bf16.msra.mxu0 %v1392
      %1662 = vmatpush.bf16.msra.mxu0 %v1384
      %1663 = vmatmul.bf16.gmra.mxu0 %v1121
      %v1664 = vpop.f32.mrf.mxu0
      %v1665 = vadd.f32 %v1514, %v1664
      %v1666 = vpop.f32.mrf.mxu0
      %1667 = vdwg.mxu0
      %1668 = vmatpush.bf16.msra.mxu0 %v1504
      %1669 = vmatpush.bf16.msra.mxu0 %v1496
      %1670 = vmatpush.bf16.msra.mxu0 %v1488
      %1671 = vmatpush.bf16.msra.mxu0 %v1480
      %1672 = vmatpush.bf16.msra.mxu0 %v1472
      %1673 = vmatpush.bf16.msra.mxu0 %v1464
      %1674 = vmatpush.bf16.msra.mxu0 %v1456
      %1675 = vmatpush.bf16.msra.mxu0 %v1448
      %1676 = vmatmul.bf16.gmra.mxu0 %v1122
      %v1677 = vpop.f32.mrf.mxu0
      %v1678 = vadd.f32 %v1665, %v1677
      %v1679 = vpop.f32.mrf.mxu0
      %1680 = vdwg.mxu0
      %1681 = vmatpush.bf16.msra.mxu0 %v1441
      %1682 = vmatpush.bf16.msra.mxu0 %v1433
      %1683 = vmatpush.bf16.msra.mxu0 %v1425
      %1684 = vmatpush.bf16.msra.mxu0 %v1417
      %1685 = vmatpush.bf16.msra.mxu0 %v1409
      %1686 = vmatpush.bf16.msra.mxu0 %v1401
      %1687 = vmatpush.bf16.msra.mxu0 %v1393
      %1688 = vmatpush.bf16.msra.mxu0 %v1385
      %1689 = vmatmul.bf16.gmra.mxu0 %v1121
      %v1690 = vpop.f32.mrf.mxu0
      %v1691 = vadd.f32 %v1515, %v1690
      %v1692 = vpop.f32.mrf.mxu0
      %1693 = vdwg.mxu0
      %1694 = vmatpush.bf16.msra.mxu0 %v1505
      %1695 = vmatpush.bf16.msra.mxu0 %v1497
      %1696 = vmatpush.bf16.msra.mxu0 %v1489
      %1697 = vmatpush.bf16.msra.mxu0 %v1481
      %1698 = vmatpush.bf16.msra.mxu0 %v1473
      %1699 = vmatpush.bf16.msra.mxu0 %v1465
      %1700 = vmatpush.bf16.msra.mxu0 %v1457
      %1701 = vmatpush.bf16.msra.mxu0 %v1449
      %1702 = vmatmul.bf16.gmra.mxu0 %v1122
      %v1703 = vpop.f32.mrf.mxu0
      %v1704 = vadd.f32 %v1691, %v1703
      %v1705 = vpop.f32.mrf.mxu0
      %1706 = vdwg.mxu0
      %1707 = vmatpush.bf16.msra.mxu0 %v1442
      %1708 = vmatpush.bf16.msra.mxu0 %v1434
      %1709 = vmatpush.bf16.msra.mxu0 %v1426
      %1710 = vmatpush.bf16.msra.mxu0 %v1418
      %1711 = vmatpush.bf16.msra.mxu0 %v1410
      %1712 = vmatpush.bf16.msra.mxu0 %v1402
      %1713 = vmatpush.bf16.msra.mxu0 %v1394
      %1714 = vmatpush.bf16.msra.mxu0 %v1386
      %1715 = vmatmul.bf16.gmra.mxu0 %v1121
      %v1716 = vpop.f32.mrf.mxu0
      %v1717 = vadd.f32 %v1516, %v1716
      %v1718 = vpop.f32.mrf.mxu0
      %1719 = vdwg.mxu0
      %1720 = vmatpush.bf16.msra.mxu0 %v1506
      %1721 = vmatpush.bf16.msra.mxu0 %v1498
      %1722 = vmatpush.bf16.msra.mxu0 %v1490
      %1723 = vmatpush.bf16.msra.mxu0 %v1482
      %1724 = vmatpush.bf16.msra.mxu0 %v1474
      %1725 = vmatpush.bf16.msra.mxu0 %v1466
      %1726 = vmatpush.bf16.msra.mxu0 %v1458
      %1727 = vmatpush.bf16.msra.mxu0 %v1450
      %1728 = vmatmul.bf16.gmra.mxu0 %v1122
      %v1729 = vpop.f32.mrf.mxu0
      %v1730 = vadd.f32 %v1717, %v1729
      %v1731 = vpop.f32.mrf.mxu0
      %1732 = vdwg.mxu0
      %v1733 = vmax.f32 %v1548, 0.0
      %v1734 = vmax.f32 %v1574, 0.0
      %v1735 = vmax.f32 %v1600, 0.0
      %v1736 = vmax.f32 %v1626, 0.0
      %v1737 = vmax.f32 %v1652, 0.0
      %v1738 = vmax.f32 %v1678, 0.0
      %v1739 = vmax.f32 %v1704, 0.0
      %v1740 = vmax.f32 %v1730, 0.0
      %v1741 = vpack.c.bf16 %v1733, %v1733
      %v1742 = vpack.c.bf16 %v1734, %v1734
      %v1743 = vpack.c.bf16 %v1735, %v1735
      %v1744 = vpack.c.bf16 %v1736, %v1736
      %v1745 = vpack.c.bf16 %v1737, %v1737
      %v1746 = vpack.c.bf16 %v1738, %v1738
      %v1747 = vpack.c.bf16 %v1739, %v1739
      %v1748 = vpack.c.bf16 %v1740, %v1740
      %v1749 = vld [vmem:[%s732] sm:$0xff]
      %v1750 = vld [vmem:[%s732 + $0x8] sm:$0xff]
      %v1751 = vld [vmem:[%s732 + $0x10] sm:$0xff]
      %v1752 = vld [vmem:[%s732 + $0x18] sm:$0xff]
      %v1753 = vld [vmem:[%s732 + $0x20] sm:$0xff]
      %v1754 = vld [vmem:[%s732 + $0x28] sm:$0xff]
      %v1755 = vld [vmem:[%s732 + $0x30] sm:$0xff]
      %v1756 = vld [vmem:[%s732 + $0x38] sm:$0xff]
      %v1757 = vld [vmem:[%s732 + $0x40] sm:$0xff]
      %v1758 = vld [vmem:[%s732 + $0x48] sm:$0xff]
      %v1759 = vld [vmem:[%s732 + $0x50] sm:$0xff]
      %v1760 = vld [vmem:[%s732 + $0x58] sm:$0xff]
      %v1761 = vld [vmem:[%s732 + $0x60] sm:$0xff]
      %v1762 = vld [vmem:[%s732 + $0x68] sm:$0xff]
      %v1763 = vld [vmem:[%s732 + $0x70] sm:$0xff]
      %v1764 = vld [vmem:[%s732 + $0x78] sm:$0xff]
      %v1765 = vld [vmem:[%s732 + $0x80] sm:$0xff]
      %v1766 = vld [vmem:[%s732 + $0x88] sm:$0xff]
      %v1767 = vld [vmem:[%s732 + $0x90] sm:$0xff]
      %v1768 = vld [vmem:[%s732 + $0x98] sm:$0xff]
      %v1769 = vld [vmem:[%s732 + $0xa0] sm:$0xff]
      %v1770 = vld [vmem:[%s732 + $0xa8] sm:$0xff]
      %v1771 = vld [vmem:[%s732 + $0xb0] sm:$0xff]
      %v1772 = vld [vmem:[%s732 + $0xb8] sm:$0xff]
      %v1773 = vld [vmem:[%s732 + $0xc0] sm:$0xff]
      %v1774 = vld [vmem:[%s732 + $0xc8] sm:$0xff]
      %v1775 = vld [vmem:[%s732 + $0xd0] sm:$0xff]
      %v1776 = vld [vmem:[%s732 + $0xd8] sm:$0xff]
      %v1777 = vld [vmem:[%s732 + $0xe0] sm:$0xff]
      %v1778 = vld [vmem:[%s732 + $0xe8] sm:$0xff]
      %v1779 = vld [vmem:[%s732 + $0xf0] sm:$0xff]
      %v1780 = vld [vmem:[%s732 + $0xf8] sm:$0xff]
      %v1781 = vld [vmem:[%s732 + $0x100] sm:$0xff]
      %v1782 = vld [vmem:[%s732 + $0x108] sm:$0xff]
      %v1783 = vld [vmem:[%s732 + $0x110] sm:$0xff]
      %v1784 = vld [vmem:[%s732 + $0x118] sm:$0xff]
      %v1785 = vld [vmem:[%s732 + $0x120] sm:$0xff]
      %v1786 = vld [vmem:[%s732 + $0x128] sm:$0xff]
      %v1787 = vld [vmem:[%s732 + $0x130] sm:$0xff]
      %v1788 = vld [vmem:[%s732 + $0x138] sm:$0xff]
      %v1789 = vld [vmem:[%s732 + $0x140] sm:$0xff]
      %v1790 = vld [vmem:[%s732 + $0x148] sm:$0xff]
      %v1791 = vld [vmem:[%s732 + $0x150] sm:$0xff]
      %v1792 = vld [vmem:[%s732 + $0x158] sm:$0xff]
      %v1793 = vld [vmem:[%s732 + $0x160] sm:$0xff]
      %v1794 = vld [vmem:[%s732 + $0x168] sm:$0xff]
      %v1795 = vld [vmem:[%s732 + $0x170] sm:$0xff]
      %v1796 = vld [vmem:[%s732 + $0x178] sm:$0xff]
      %v1797 = vld [vmem:[%s732 + $0x180] sm:$0xff]
      %v1798 = vld [vmem:[%s732 + $0x188] sm:$0xff]
      %v1799 = vld [vmem:[%s732 + $0x190] sm:$0xff]
      %v1800 = vld [vmem:[%s732 + $0x198] sm:$0xff]
      %v1801 = vld [vmem:[%s732 + $0x1a0] sm:$0xff]
      %v1802 = vld [vmem:[%s732 + $0x1a8] sm:$0xff]
      %v1803 = vld [vmem:[%s732 + $0x1b0] sm:$0xff]
      %v1804 = vld [vmem:[%s732 + $0x1b8] sm:$0xff]
      %v1805 = vld [vmem:[%s732 + $0x1c0] sm:$0xff]
      %v1806 = vld [vmem:[%s732 + $0x1c8] sm:$0xff]
      %v1807 = vld [vmem:[%s732 + $0x1d0] sm:$0xff]
      %v1808 = vld [vmem:[%s732 + $0x1d8] sm:$0xff]
      %v1809 = vld [vmem:[%s732 + $0x1e0] sm:$0xff]
      %v1810 = vld [vmem:[%s732 + $0x1e8] sm:$0xff]
      %v1811 = vld [vmem:[%s732 + $0x1f0] sm:$0xff]
      %v1812 = vld [vmem:[%s732 + $0x1f8] sm:$0xff]
      %v1813 = vld [vmem:[%s732 + $0x200] sm:$0xff]
      %v1814 = vld [vmem:[%s732 + $0x208] sm:$0xff]
      %v1815 = vld [vmem:[%s732 + $0x210] sm:$0xff]
      %v1816 = vld [vmem:[%s732 + $0x218] sm:$0xff]
      %v1817 = vld [vmem:[%s732 + $0x220] sm:$0xff]
      %v1818 = vld [vmem:[%s732 + $0x228] sm:$0xff]
      %v1819 = vld [vmem:[%s732 + $0x230] sm:$0xff]
      %v1820 = vld [vmem:[%s732 + $0x238] sm:$0xff]
      %v1821 = vld [vmem:[%s732 + $0x240] sm:$0xff]
      %v1822 = vld [vmem:[%s732 + $0x248] sm:$0xff]
      %v1823 = vld [vmem:[%s732 + $0x250] sm:$0xff]
      %v1824 = vld [vmem:[%s732 + $0x258] sm:$0xff]
      %v1825 = vld [vmem:[%s732 + $0x260] sm:$0xff]
      %v1826 = vld [vmem:[%s732 + $0x268] sm:$0xff]
      %v1827 = vld [vmem:[%s732 + $0x270] sm:$0xff]
      %v1828 = vld [vmem:[%s732 + $0x278] sm:$0xff]
      %v1829 = vld [vmem:[%s732 + $0x280] sm:$0xff]
      %v1830 = vld [vmem:[%s732 + $0x288] sm:$0xff]
      %v1831 = vld [vmem:[%s732 + $0x290] sm:$0xff]
      %v1832 = vld [vmem:[%s732 + $0x298] sm:$0xff]
      %v1833 = vld [vmem:[%s732 + $0x2a0] sm:$0xff]
      %v1834 = vld [vmem:[%s732 + $0x2a8] sm:$0xff]
      %v1835 = vld [vmem:[%s732 + $0x2b0] sm:$0xff]
      %v1836 = vld [vmem:[%s732 + $0x2b8] sm:$0xff]
      %v1837 = vld [vmem:[%s732 + $0x2c0] sm:$0xff]
      %v1838 = vld [vmem:[%s732 + $0x2c8] sm:$0xff]
      %v1839 = vld [vmem:[%s732 + $0x2d0] sm:$0xff]
      %v1840 = vld [vmem:[%s732 + $0x2d8] sm:$0xff]
      %v1841 = vld [vmem:[%s732 + $0x2e0] sm:$0xff]
      %v1842 = vld [vmem:[%s732 + $0x2e8] sm:$0xff]
      %v1843 = vld [vmem:[%s732 + $0x2f0] sm:$0xff]
      %v1844 = vld [vmem:[%s732 + $0x2f8] sm:$0xff]
      %v1845 = vld [vmem:[%s732 + $0x300] sm:$0xff]
      %v1846 = vld [vmem:[%s732 + $0x308] sm:$0xff]
      %v1847 = vld [vmem:[%s732 + $0x310] sm:$0xff]
      %v1848 = vld [vmem:[%s732 + $0x318] sm:$0xff]
      %v1849 = vld [vmem:[%s732 + $0x320] sm:$0xff]
      %v1850 = vld [vmem:[%s732 + $0x328] sm:$0xff]
      %v1851 = vld [vmem:[%s732 + $0x330] sm:$0xff]
      %v1852 = vld [vmem:[%s732 + $0x338] sm:$0xff]
      %v1853 = vld [vmem:[%s732 + $0x340] sm:$0xff]
      %v1854 = vld [vmem:[%s732 + $0x348] sm:$0xff]
      %v1855 = vld [vmem:[%s732 + $0x350] sm:$0xff]
      %v1856 = vld [vmem:[%s732 + $0x358] sm:$0xff]
      %v1857 = vld [vmem:[%s732 + $0x360] sm:$0xff]
      %v1858 = vld [vmem:[%s732 + $0x368] sm:$0xff]
      %v1859 = vld [vmem:[%s732 + $0x370] sm:$0xff]
      %v1860 = vld [vmem:[%s732 + $0x378] sm:$0xff]
      %v1861 = vld [vmem:[%s732 + $0x380] sm:$0xff]
      %v1862 = vld [vmem:[%s732 + $0x388] sm:$0xff]
      %v1863 = vld [vmem:[%s732 + $0x390] sm:$0xff]
      %v1864 = vld [vmem:[%s732 + $0x398] sm:$0xff]
      %v1865 = vld [vmem:[%s732 + $0x3a0] sm:$0xff]
      %v1866 = vld [vmem:[%s732 + $0x3a8] sm:$0xff]
      %v1867 = vld [vmem:[%s732 + $0x3b0] sm:$0xff]
      %v1868 = vld [vmem:[%s732 + $0x3b8] sm:$0xff]
      %v1869 = vld [vmem:[%s732 + $0x3c0] sm:$0xff]
      %v1870 = vld [vmem:[%s732 + $0x3c8] sm:$0xff]
      %v1871 = vld [vmem:[%s732 + $0x3d0] sm:$0xff]
      %v1872 = vld [vmem:[%s732 + $0x3d8] sm:$0xff]
      %v1873 = vld [vmem:[%s732 + $0x3e0] sm:$0xff]
      %v1874 = vld [vmem:[%s732 + $0x3e8] sm:$0xff]
      %v1875 = vld [vmem:[%s732 + $0x3f0] sm:$0xff]
      %v1876 = vld [vmem:[%s732 + $0x3f8] sm:$0xff]
      %v1877 = vld [vmem:[%s732 + $0x400] sm:$0xff]
      %v1878 = vld [vmem:[%s732 + $0x408] sm:$0xff]
      %v1879 = vld [vmem:[%s732 + $0x410] sm:$0xff]
      %v1880 = vld [vmem:[%s732 + $0x418] sm:$0xff]
      %v1881 = vld [vmem:[%s732 + $0x420] sm:$0xff]
      %v1882 = vld [vmem:[%s732 + $0x428] sm:$0xff]
      %v1883 = vld [vmem:[%s732 + $0x430] sm:$0xff]
      %v1884 = vld [vmem:[%s732 + $0x438] sm:$0xff]
      %v1885 = vld [vmem:[%s732 + $0x440] sm:$0xff]
      %v1886 = vld [vmem:[%s732 + $0x448] sm:$0xff]
      %v1887 = vld [vmem:[%s732 + $0x450] sm:$0xff]
      %v1888 = vld [vmem:[%s732 + $0x458] sm:$0xff]
      %v1889 = vld [vmem:[%s732 + $0x460] sm:$0xff]
      %v1890 = vld [vmem:[%s732 + $0x468] sm:$0xff]
      %v1891 = vld [vmem:[%s732 + $0x470] sm:$0xff]
      %v1892 = vld [vmem:[%s732 + $0x478] sm:$0xff]
      %v1893 = vld [vmem:[%s732 + $0x480] sm:$0xff]
      %v1894 = vld [vmem:[%s732 + $0x488] sm:$0xff]
      %v1895 = vld [vmem:[%s732 + $0x490] sm:$0xff]
      %v1896 = vld [vmem:[%s732 + $0x498] sm:$0xff]
      %v1897 = vld [vmem:[%s732 + $0x4a0] sm:$0xff]
      %v1898 = vld [vmem:[%s732 + $0x4a8] sm:$0xff]
      %v1899 = vld [vmem:[%s732 + $0x4b0] sm:$0xff]
      %v1900 = vld [vmem:[%s732 + $0x4b8] sm:$0xff]
      %v1901 = vld [vmem:[%s732 + $0x4c0] sm:$0xff]
      %v1902 = vld [vmem:[%s732 + $0x4c8] sm:$0xff]
      %v1903 = vld [vmem:[%s732 + $0x4d0] sm:$0xff]
      %v1904 = vld [vmem:[%s732 + $0x4d8] sm:$0xff]
      %v1905 = vld [vmem:[%s732 + $0x4e0] sm:$0xff]
      %v1906 = vld [vmem:[%s732 + $0x4e8] sm:$0xff]
      %v1907 = vld [vmem:[%s732 + $0x4f0] sm:$0xff]
      %v1908 = vld [vmem:[%s732 + $0x4f8] sm:$0xff]
      %v1909 = vld [vmem:[%s732 + $0x500] sm:$0xff]
      %v1910 = vld [vmem:[%s732 + $0x508] sm:$0xff]
      %v1911 = vld [vmem:[%s732 + $0x510] sm:$0xff]
      %v1912 = vld [vmem:[%s732 + $0x518] sm:$0xff]
      %v1913 = vld [vmem:[%s732 + $0x520] sm:$0xff]
      %v1914 = vld [vmem:[%s732 + $0x528] sm:$0xff]
      %v1915 = vld [vmem:[%s732 + $0x530] sm:$0xff]
      %v1916 = vld [vmem:[%s732 + $0x538] sm:$0xff]
      %v1917 = vld [vmem:[%s732 + $0x540] sm:$0xff]
      %v1918 = vld [vmem:[%s732 + $0x548] sm:$0xff]
      %v1919 = vld [vmem:[%s732 + $0x550] sm:$0xff]
      %v1920 = vld [vmem:[%s732 + $0x558] sm:$0xff]
      %v1921 = vld [vmem:[%s732 + $0x560] sm:$0xff]
      %v1922 = vld [vmem:[%s732 + $0x568] sm:$0xff]
      %v1923 = vld [vmem:[%s732 + $0x570] sm:$0xff]
      %v1924 = vld [vmem:[%s732 + $0x578] sm:$0xff]
      %v1925 = vld [vmem:[%s732 + $0x580] sm:$0xff]
      %v1926 = vld [vmem:[%s732 + $0x588] sm:$0xff]
      %v1927 = vld [vmem:[%s732 + $0x590] sm:$0xff]
      %v1928 = vld [vmem:[%s732 + $0x598] sm:$0xff]
      %v1929 = vld [vmem:[%s732 + $0x5a0] sm:$0xff]
      %v1930 = vld [vmem:[%s732 + $0x5a8] sm:$0xff]
      %v1931 = vld [vmem:[%s732 + $0x5b0] sm:$0xff]
      %v1932 = vld [vmem:[%s732 + $0x5b8] sm:$0xff]
      %v1933 = vld [vmem:[%s732 + $0x5c0] sm:$0xff]
      %v1934 = vld [vmem:[%s732 + $0x5c8] sm:$0xff]
      %v1935 = vld [vmem:[%s732 + $0x5d0] sm:$0xff]
      %v1936 = vld [vmem:[%s732 + $0x5d8] sm:$0xff]
      %v1937 = vld [vmem:[%s732 + $0x5e0] sm:$0xff]
      %v1938 = vld [vmem:[%s732 + $0x5e8] sm:$0xff]
      %v1939 = vld [vmem:[%s732 + $0x5f0] sm:$0xff]
      %v1940 = vld [vmem:[%s732 + $0x5f8] sm:$0xff]
      %v1941 = vld [vmem:[%s732 + $0x600] sm:$0xff]
      %v1942 = vld [vmem:[%s732 + $0x608] sm:$0xff]
      %v1943 = vld [vmem:[%s732 + $0x610] sm:$0xff]
      %v1944 = vld [vmem:[%s732 + $0x618] sm:$0xff]
      %v1945 = vld [vmem:[%s732 + $0x620] sm:$0xff]
      %v1946 = vld [vmem:[%s732 + $0x628] sm:$0xff]
      %v1947 = vld [vmem:[%s732 + $0x630] sm:$0xff]
      %v1948 = vld [vmem:[%s732 + $0x638] sm:$0xff]
      %v1949 = vld [vmem:[%s732 + $0x640] sm:$0xff]
      %v1950 = vld [vmem:[%s732 + $0x648] sm:$0xff]
      %v1951 = vld [vmem:[%s732 + $0x650] sm:$0xff]
      %v1952 = vld [vmem:[%s732 + $0x658] sm:$0xff]
      %v1953 = vld [vmem:[%s732 + $0x660] sm:$0xff]
      %v1954 = vld [vmem:[%s732 + $0x668] sm:$0xff]
      %v1955 = vld [vmem:[%s732 + $0x670] sm:$0xff]
      %v1956 = vld [vmem:[%s732 + $0x678] sm:$0xff]
      %v1957 = vld [vmem:[%s732 + $0x680] sm:$0xff]
      %v1958 = vld [vmem:[%s732 + $0x688] sm:$0xff]
      %v1959 = vld [vmem:[%s732 + $0x690] sm:$0xff]
      %v1960 = vld [vmem:[%s732 + $0x698] sm:$0xff]
      %v1961 = vld [vmem:[%s732 + $0x6a0] sm:$0xff]
      %v1962 = vld [vmem:[%s732 + $0x6a8] sm:$0xff]
      %v1963 = vld [vmem:[%s732 + $0x6b0] sm:$0xff]
      %v1964 = vld [vmem:[%s732 + $0x6b8] sm:$0xff]
      %v1965 = vld [vmem:[%s732 + $0x6c0] sm:$0xff]
      %v1966 = vld [vmem:[%s732 + $0x6c8] sm:$0xff]
      %v1967 = vld [vmem:[%s732 + $0x6d0] sm:$0xff]
      %v1968 = vld [vmem:[%s732 + $0x6d8] sm:$0xff]
      %v1969 = vld [vmem:[%s732 + $0x6e0] sm:$0xff]
      %v1970 = vld [vmem:[%s732 + $0x6e8] sm:$0xff]
      %v1971 = vld [vmem:[%s732 + $0x6f0] sm:$0xff]
      %v1972 = vld [vmem:[%s732 + $0x6f8] sm:$0xff]
      %v1973 = vld [vmem:[%s732 + $0x700] sm:$0xff]
      %v1974 = vld [vmem:[%s732 + $0x708] sm:$0xff]
      %v1975 = vld [vmem:[%s732 + $0x710] sm:$0xff]
      %v1976 = vld [vmem:[%s732 + $0x718] sm:$0xff]
      %v1977 = vld [vmem:[%s732 + $0x720] sm:$0xff]
      %v1978 = vld [vmem:[%s732 + $0x728] sm:$0xff]
      %v1979 = vld [vmem:[%s732 + $0x730] sm:$0xff]
      %v1980 = vld [vmem:[%s732 + $0x738] sm:$0xff]
      %v1981 = vld [vmem:[%s732 + $0x740] sm:$0xff]
      %v1982 = vld [vmem:[%s732 + $0x748] sm:$0xff]
      %v1983 = vld [vmem:[%s732 + $0x750] sm:$0xff]
      %v1984 = vld [vmem:[%s732 + $0x758] sm:$0xff]
      %v1985 = vld [vmem:[%s732 + $0x760] sm:$0xff]
      %v1986 = vld [vmem:[%s732 + $0x768] sm:$0xff]
      %v1987 = vld [vmem:[%s732 + $0x770] sm:$0xff]
      %v1988 = vld [vmem:[%s732 + $0x778] sm:$0xff]
      %v1989 = vld [vmem:[%s732 + $0x780] sm:$0xff]
      %v1990 = vld [vmem:[%s732 + $0x788] sm:$0xff]
      %v1991 = vld [vmem:[%s732 + $0x790] sm:$0xff]
      %v1992 = vld [vmem:[%s732 + $0x798] sm:$0xff]
      %v1993 = vld [vmem:[%s732 + $0x7a0] sm:$0xff]
      %v1994 = vld [vmem:[%s732 + $0x7a8] sm:$0xff]
      %v1995 = vld [vmem:[%s732 + $0x7b0] sm:$0xff]
      %v1996 = vld [vmem:[%s732 + $0x7b8] sm:$0xff]
      %v1997 = vld [vmem:[%s732 + $0x7c0] sm:$0xff]
      %v1998 = vld [vmem:[%s732 + $0x7c8] sm:$0xff]
      %v1999 = vld [vmem:[%s732 + $0x7d0] sm:$0xff]
      %v2000 = vld [vmem:[%s732 + $0x7d8] sm:$0xff]
      %v2001 = vld [vmem:[%s732 + $0x7e0] sm:$0xff]
      %v2002 = vld [vmem:[%s732 + $0x7e8] sm:$0xff]
      %v2003 = vld [vmem:[%s732 + $0x7f0] sm:$0xff]
      %v2004 = vld [vmem:[%s732 + $0x7f8] sm:$0xff]
      %v2005 = vpack.c.bf16 %v1751, %v1749
      %v2006 = vpack.c.bf16 %v1752, %v1750
      %v2007 = vpack.c.bf16 %v1755, %v1753
      %v2008 = vpack.c.bf16 %v1756, %v1754
      %v2009 = vpack.c.bf16 %v1759, %v1757
      %v2010 = vpack.c.bf16 %v1760, %v1758
      %v2011 = vpack.c.bf16 %v1763, %v1761
      %v2012 = vpack.c.bf16 %v1764, %v1762
      %v2013 = vpack.c.bf16 %v1767, %v1765
      %v2014 = vpack.c.bf16 %v1768, %v1766
      %v2015 = vpack.c.bf16 %v1771, %v1769
      %v2016 = vpack.c.bf16 %v1772, %v1770
      %v2017 = vpack.c.bf16 %v1775, %v1773
      %v2018 = vpack.c.bf16 %v1776, %v1774
      %v2019 = vpack.c.bf16 %v1779, %v1777
      %v2020 = vpack.c.bf16 %v1780, %v1778
      %v2021 = vpack.c.bf16 %v1783, %v1781
      %v2022 = vpack.c.bf16 %v1784, %v1782
      %v2023 = vpack.c.bf16 %v1787, %v1785
      %v2024 = vpack.c.bf16 %v1788, %v1786
      %v2025 = vpack.c.bf16 %v1791, %v1789
      %v2026 = vpack.c.bf16 %v1792, %v1790
      %v2027 = vpack.c.bf16 %v1795, %v1793
      %v2028 = vpack.c.bf16 %v1796, %v1794
      %v2029 = vpack.c.bf16 %v1799, %v1797
      %v2030 = vpack.c.bf16 %v1800, %v1798
      %v2031 = vpack.c.bf16 %v1803, %v1801
      %v2032 = vpack.c.bf16 %v1804, %v1802
      %v2033 = vpack.c.bf16 %v1807, %v1805
      %v2034 = vpack.c.bf16 %v1808, %v1806
      %v2035 = vpack.c.bf16 %v1811, %v1809
      %v2036 = vpack.c.bf16 %v1812, %v1810
      %v2037 = vpack.c.bf16 %v1815, %v1813
      %v2038 = vpack.c.bf16 %v1816, %v1814
      %v2039 = vpack.c.bf16 %v1819, %v1817
      %v2040 = vpack.c.bf16 %v1820, %v1818
      %v2041 = vpack.c.bf16 %v1823, %v1821
      %v2042 = vpack.c.bf16 %v1824, %v1822
      %v2043 = vpack.c.bf16 %v1827, %v1825
      %v2044 = vpack.c.bf16 %v1828, %v1826
      %v2045 = vpack.c.bf16 %v1831, %v1829
      %v2046 = vpack.c.bf16 %v1832, %v1830
      %v2047 = vpack.c.bf16 %v1835, %v1833
      %v2048 = vpack.c.bf16 %v1836, %v1834
      %v2049 = vpack.c.bf16 %v1839, %v1837
      %v2050 = vpack.c.bf16 %v1840, %v1838
      %v2051 = vpack.c.bf16 %v1843, %v1841
      %v2052 = vpack.c.bf16 %v1844, %v1842
      %v2053 = vpack.c.bf16 %v1847, %v1845
      %v2054 = vpack.c.bf16 %v1848, %v1846
      %v2055 = vpack.c.bf16 %v1851, %v1849
      %v2056 = vpack.c.bf16 %v1852, %v1850
      %v2057 = vpack.c.bf16 %v1855, %v1853
      %v2058 = vpack.c.bf16 %v1856, %v1854
      %v2059 = vpack.c.bf16 %v1859, %v1857
      %v2060 = vpack.c.bf16 %v1860, %v1858
      %v2061 = vpack.c.bf16 %v1863, %v1861
      %v2062 = vpack.c.bf16 %v1864, %v1862
      %v2063 = vpack.c.bf16 %v1867, %v1865
      %v2064 = vpack.c.bf16 %v1868, %v1866
      %v2065 = vpack.c.bf16 %v1871, %v1869
      %v2066 = vpack.c.bf16 %v1872, %v1870
      %v2067 = vpack.c.bf16 %v1875, %v1873
      %v2068 = vpack.c.bf16 %v1876, %v1874
      %v2069 = vpack.c.bf16 %v1879, %v1877
      %v2070 = vpack.c.bf16 %v1880, %v1878
      %v2071 = vpack.c.bf16 %v1883, %v1881
      %v2072 = vpack.c.bf16 %v1884, %v1882
      %v2073 = vpack.c.bf16 %v1887, %v1885
      %v2074 = vpack.c.bf16 %v1888, %v1886
      %v2075 = vpack.c.bf16 %v1891, %v1889
      %v2076 = vpack.c.bf16 %v1892, %v1890
      %v2077 = vpack.c.bf16 %v1895, %v1893
      %v2078 = vpack.c.bf16 %v1896, %v1894
      %v2079 = vpack.c.bf16 %v1899, %v1897
      %v2080 = vpack.c.bf16 %v1900, %v1898
      %v2081 = vpack.c.bf16 %v1903, %v1901
      %v2082 = vpack.c.bf16 %v1904, %v1902
      %v2083 = vpack.c.bf16 %v1907, %v1905
      %v2084 = vpack.c.bf16 %v1908, %v1906
      %v2085 = vpack.c.bf16 %v1911, %v1909
      %v2086 = vpack.c.bf16 %v1912, %v1910
      %v2087 = vpack.c.bf16 %v1915, %v1913
      %v2088 = vpack.c.bf16 %v1916, %v1914
      %v2089 = vpack.c.bf16 %v1919, %v1917
      %v2090 = vpack.c.bf16 %v1920, %v1918
      %v2091 = vpack.c.bf16 %v1923, %v1921
      %v2092 = vpack.c.bf16 %v1924, %v1922
      %v2093 = vpack.c.bf16 %v1927, %v1925
      %v2094 = vpack.c.bf16 %v1928, %v1926
      %v2095 = vpack.c.bf16 %v1931, %v1929
      %v2096 = vpack.c.bf16 %v1932, %v1930
      %v2097 = vpack.c.bf16 %v1935, %v1933
      %v2098 = vpack.c.bf16 %v1936, %v1934
      %v2099 = vpack.c.bf16 %v1939, %v1937
      %v2100 = vpack.c.bf16 %v1940, %v1938
      %v2101 = vpack.c.bf16 %v1943, %v1941
      %v2102 = vpack.c.bf16 %v1944, %v1942
      %v2103 = vpack.c.bf16 %v1947, %v1945
      %v2104 = vpack.c.bf16 %v1948, %v1946
      %v2105 = vpack.c.bf16 %v1951, %v1949
      %v2106 = vpack.c.bf16 %v1952, %v1950
      %v2107 = vpack.c.bf16 %v1955, %v1953
      %v2108 = vpack.c.bf16 %v1956, %v1954
      %v2109 = vpack.c.bf16 %v1959, %v1957
      %v2110 = vpack.c.bf16 %v1960, %v1958
      %v2111 = vpack.c.bf16 %v1963, %v1961
      %v2112 = vpack.c.bf16 %v1964, %v1962
      %v2113 = vpack.c.bf16 %v1967, %v1965
      %v2114 = vpack.c.bf16 %v1968, %v1966
      %v2115 = vpack.c.bf16 %v1971, %v1969
      %v2116 = vpack.c.bf16 %v1972, %v1970
      %v2117 = vpack.c.bf16 %v1975, %v1973
      %v2118 = vpack.c.bf16 %v1976, %v1974
      %v2119 = vpack.c.bf16 %v1979, %v1977
      %v2120 = vpack.c.bf16 %v1980, %v1978
      %v2121 = vpack.c.bf16 %v1983, %v1981
      %v2122 = vpack.c.bf16 %v1984, %v1982
      %v2123 = vpack.c.bf16 %v1987, %v1985
      %v2124 = vpack.c.bf16 %v1988, %v1986
      %v2125 = vpack.c.bf16 %v1991, %v1989
      %v2126 = vpack.c.bf16 %v1992, %v1990
      %v2127 = vpack.c.bf16 %v1995, %v1993
      %v2128 = vpack.c.bf16 %v1996, %v1994
      %v2129 = vpack.c.bf16 %v1999, %v1997
      %v2130 = vpack.c.bf16 %v2000, %v1998
      %v2131 = vpack.c.bf16 %v2003, %v2001
      %v2132 = vpack.c.bf16 %v2004, %v2002
      %v2133 = vld [vmem:[%s736] sm:$0x3]
      %v2135 = vperm.slane %v2133, 0
      %v2136 = vperm.slane %v2133, 1
      %2139 = vmatpush.bf16.msra.mxu0 %v2019
      %2140 = vmatpush.bf16.msra.mxu0 %v2017
      %2141 = vmatpush.bf16.msra.mxu0 %v2015
      %2142 = vmatpush.bf16.msra.mxu0 %v2013
      %2143 = vmatpush.bf16.msra.mxu0 %v2011
      %2144 = vmatpush.bf16.msra.mxu0 %v2009
      %2145 = vmatpush.bf16.msra.mxu0 %v2007
      %2146 = vmatpush.bf16.msra.mxu0 %v2005
      %2147 = vmatmul.bf16.gmra.mxu0 %v1741
      %v2148 = vpop.f32.mrf.mxu0
      %v2149 = vadd.f32 %v2135, %v2148
      %v2150 = vpop.f32.mrf.mxu0
      %2151 = vdwg.mxu0
      %2152 = vmatpush.bf16.msra.mxu0 %v2035
      %2153 = vmatpush.bf16.msra.mxu0 %v2033
      %2154 = vmatpush.bf16.msra.mxu0 %v2031
      %2155 = vmatpush.bf16.msra.mxu0 %v2029
      %2156 = vmatpush.bf16.msra.mxu0 %v2027
      %2157 = vmatpush.bf16.msra.mxu0 %v2025
      %2158 = vmatpush.bf16.msra.mxu0 %v2023
      %2159 = vmatpush.bf16.msra.mxu0 %v2021
      %2160 = vmatmul.bf16.gmra.mxu0 %v1742
      %v2161 = vpop.f32.mrf.mxu0
      %v2162 = vadd.f32 %v2149, %v2161
      %v2163 = vpop.f32.mrf.mxu0
      %2164 = vdwg.mxu0
      %2165 = vmatpush.bf16.msra.mxu0 %v2051
      %2166 = vmatpush.bf16.msra.mxu0 %v2049
      %2167 = vmatpush.bf16.msra.mxu0 %v2047
      %2168 = vmatpush.bf16.msra.mxu0 %v2045
      %2169 = vmatpush.bf16.msra.mxu0 %v2043
      %2170 = vmatpush.bf16.msra.mxu0 %v2041
      %2171 = vmatpush.bf16.msra.mxu0 %v2039
      %2172 = vmatpush.bf16.msra.mxu0 %v2037
      %2173 = vmatmul.bf16.gmra.mxu0 %v1743
      %v2174 = vpop.f32.mrf.mxu0
      %v2175 = vadd.f32 %v2162, %v2174
      %v2176 = vpop.f32.mrf.mxu0
      %2177 = vdwg.mxu0
      %2178 = vmatpush.bf16.msra.mxu0 %v2067
      %2179 = vmatpush.bf16.msra.mxu0 %v2065
      %2180 = vmatpush.bf16.msra.mxu0 %v2063
      %2181 = vmatpush.bf16.msra.mxu0 %v2061
      %2182 = vmatpush.bf16.msra.mxu0 %v2059
      %2183 = vmatpush.bf16.msra.mxu0 %v2057
      %2184 = vmatpush.bf16.msra.mxu0 %v2055
      %2185 = vmatpush.bf16.msra.mxu0 %v2053
      %2186 = vmatmul.bf16.gmra.mxu0 %v1744
      %v2187 = vpop.f32.mrf.mxu0
      %v2188 = vadd.f32 %v2175, %v2187
      %v2189 = vpop.f32.mrf.mxu0
      %2190 = vdwg.mxu0
      %2191 = vmatpush.bf16.msra.mxu0 %v2083
      %2192 = vmatpush.bf16.msra.mxu0 %v2081
      %2193 = vmatpush.bf16.msra.mxu0 %v2079
      %2194 = vmatpush.bf16.msra.mxu0 %v2077
      %2195 = vmatpush.bf16.msra.mxu0 %v2075
      %2196 = vmatpush.bf16.msra.mxu0 %v2073
      %2197 = vmatpush.bf16.msra.mxu0 %v2071
      %2198 = vmatpush.bf16.msra.mxu0 %v2069
      %2199 = vmatmul.bf16.gmra.mxu0 %v1745
      %v2200 = vpop.f32.mrf.mxu0
      %v2201 = vadd.f32 %v2188, %v2200
      %v2202 = vpop.f32.mrf.mxu0
      %2203 = vdwg.mxu0
      %2204 = vmatpush.bf16.msra.mxu0 %v2099
      %2205 = vmatpush.bf16.msra.mxu0 %v2097
      %2206 = vmatpush.bf16.msra.mxu0 %v2095
      %2207 = vmatpush.bf16.msra.mxu0 %v2093
      %2208 = vmatpush.bf16.msra.mxu0 %v2091
      %2209 = vmatpush.bf16.msra.mxu0 %v2089
      %2210 = vmatpush.bf16.msra.mxu0 %v2087
      %2211 = vmatpush.bf16.msra.mxu0 %v2085
      %2212 = vmatmul.bf16.gmra.mxu0 %v1746
      %v2213 = vpop.f32.mrf.mxu0
      %v2214 = vadd.f32 %v2201, %v2213
      %v2215 = vpop.f32.mrf.mxu0
      %2216 = vdwg.mxu0
      %2217 = vmatpush.bf16.msra.mxu0 %v2115
      %2218 = vmatpush.bf16.msra.mxu0 %v2113
      %2219 = vmatpush.bf16.msra.mxu0 %v2111
      %2220 = vmatpush.bf16.msra.mxu0 %v2109
      %2221 = vmatpush.bf16.msra.mxu0 %v2107
      %2222 = vmatpush.bf16.msra.mxu0 %v2105
      %2223 = vmatpush.bf16.msra.mxu0 %v2103
      %2224 = vmatpush.bf16.msra.mxu0 %v2101
      %2225 = vmatmul.bf16.gmra.mxu0 %v1747
      %v2226 = vpop.f32.mrf.mxu0
      %v2227 = vadd.f32 %v2214, %v2226
      %v2228 = vpop.f32.mrf.mxu0
      %2229 = vdwg.mxu0
      %2230 = vmatpush.bf16.msra.mxu0 %v2131
      %2231 = vmatpush.bf16.msra.mxu0 %v2129
      %2232 = vmatpush.bf16.msra.mxu0 %v2127
      %2233 = vmatpush.bf16.msra.mxu0 %v2125
      %2234 = vmatpush.bf16.msra.mxu0 %v2123
      %2235 = vmatpush.bf16.msra.mxu0 %v2121
      %2236 = vmatpush.bf16.msra.mxu0 %v2119
      %2237 = vmatpush.bf16.msra.mxu0 %v2117
      %2238 = vmatmul.bf16.gmra.mxu0 %v1748
      %v2239 = vpop.f32.mrf.mxu0
      %v2240 = vadd.f32 %v2227, %v2239
      %v2241 = vpop.f32.mrf.mxu0
      %2242 = vdwg.mxu0
      %2243 = vmatpush.bf16.msra.mxu0 %v2020
      %2244 = vmatpush.bf16.msra.mxu0 %v2018
      %2245 = vmatpush.bf16.msra.mxu0 %v2016
      %2246 = vmatpush.bf16.msra.mxu0 %v2014
      %2247 = vmatpush.bf16.msra.mxu0 %v2012
      %2248 = vmatpush.bf16.msra.mxu0 %v2010
      %2249 = vmatpush.bf16.msra.mxu0 %v2008
      %2250 = vmatpush.bf16.msra.mxu0 %v2006
      %2251 = vmatmul.bf16.gmra.mxu0 %v1741
      %v2252 = vpop.f32.mrf.mxu0
      %v2253 = vadd.f32 %v2136, %v2252
      %v2254 = vpop.f32.mrf.mxu0
      %2255 = vdwg.mxu0
      %2256 = vmatpush.bf16.msra.mxu0 %v2036
      %2257 = vmatpush.bf16.msra.mxu0 %v2034
      %2258 = vmatpush.bf16.msra.mxu0 %v2032
      %2259 = vmatpush.bf16.msra.mxu0 %v2030
      %2260 = vmatpush.bf16.msra.mxu0 %v2028
      %2261 = vmatpush.bf16.msra.mxu0 %v2026
      %2262 = vmatpush.bf16.msra.mxu0 %v2024
      %2263 = vmatpush.bf16.msra.mxu0 %v2022
      %2264 = vmatmul.bf16.gmra.mxu0 %v1742
      %v2265 = vpop.f32.mrf.mxu0
      %v2266 = vadd.f32 %v2253, %v2265
      %v2267 = vpop.f32.mrf.mxu0
      %2268 = vdwg.mxu0
      %2269 = vmatpush.bf16.msra.mxu0 %v2052
      %2270 = vmatpush.bf16.msra.mxu0 %v2050
      %2271 = vmatpush.bf16.msra.mxu0 %v2048
      %2272 = vmatpush.bf16.msra.mxu0 %v2046
      %2273 = vmatpush.bf16.msra.mxu0 %v2044
      %2274 = vmatpush.bf16.msra.mxu0 %v2042
      %2275 = vmatpush.bf16.msra.mxu0 %v2040
      %2276 = vmatpush.bf16.msra.mxu0 %v2038
      %2277 = vmatmul.bf16.gmra.mxu0 %v1743
      %v2278 = vpop.f32.mrf.mxu0
      %v2279 = vadd.f32 %v2266, %v2278
      %v2280 = vpop.f32.mrf.mxu0
      %2281 = vdwg.mxu0
      %2282 = vmatpush.bf16.msra.mxu0 %v2068
      %2283 = vmatpush.bf16.msra.mxu0 %v2066
      %2284 = vmatpush.bf16.msra.mxu0 %v2064
      %2285 = vmatpush.bf16.msra.mxu0 %v2062
      %2286 = vmatpush.bf16.msra.mxu0 %v2060
      %2287 = vmatpush.bf16.msra.mxu0 %v2058
      %2288 = vmatpush.bf16.msra.mxu0 %v2056
      %2289 = vmatpush.bf16.msra.mxu0 %v2054
      %2290 = vmatmul.bf16.gmra.mxu0 %v1744
      %v2291 = vpop.f32.mrf.mxu0
      %v2292 = vadd.f32 %v2279, %v2291
      %v2293 = vpop.f32.mrf.mxu0
      %2294 = vdwg.mxu0
      %2295 = vmatpush.bf16.msra.mxu0 %v2084
      %2296 = vmatpush.bf16.msra.mxu0 %v2082
      %2297 = vmatpush.bf16.msra.mxu0 %v2080
      %2298 = vmatpush.bf16.msra.mxu0 %v2078
      %2299 = vmatpush.bf16.msra.mxu0 %v2076
      %2300 = vmatpush.bf16.msra.mxu0 %v2074
      %2301 = vmatpush.bf16.msra.mxu0 %v2072
      %2302 = vmatpush.bf16.msra.mxu0 %v2070
      %2303 = vmatmul.bf16.gmra.mxu0 %v1745
      %v2304 = vpop.f32.mrf.mxu0
      %v2305 = vadd.f32 %v2292, %v2304
      %v2306 = vpop.f32.mrf.mxu0
      %2307 = vdwg.mxu0
      %2308 = vmatpush.bf16.msra.mxu0 %v2100
      %2309 = vmatpush.bf16.msra.mxu0 %v2098
      %2310 = vmatpush.bf16.msra.mxu0 %v2096
      %2311 = vmatpush.bf16.msra.mxu0 %v2094
      %2312 = vmatpush.bf16.msra.mxu0 %v2092
      %2313 = vmatpush.bf16.msra.mxu0 %v2090
      %2314 = vmatpush.bf16.msra.mxu0 %v2088
      %2315 = vmatpush.bf16.msra.mxu0 %v2086
      %2316 = vmatmul.bf16.gmra.mxu0 %v1746
      %v2317 = vpop.f32.mrf.mxu0
      %v2318 = vadd.f32 %v2305, %v2317
      %v2319 = vpop.f32.mrf.mxu0
      %2320 = vdwg.mxu0
      %2321 = vmatpush.bf16.msra.mxu0 %v2116
      %2322 = vmatpush.bf16.msra.mxu0 %v2114
      %2323 = vmatpush.bf16.msra.mxu0 %v2112
      %2324 = vmatpush.bf16.msra.mxu0 %v2110
      %2325 = vmatpush.bf16.msra.mxu0 %v2108
      %2326 = vmatpush.bf16.msra.mxu0 %v2106
      %2327 = vmatpush.bf16.msra.mxu0 %v2104
      %2328 = vmatpush.bf16.msra.mxu0 %v2102
      %2329 = vmatmul.bf16.gmra.mxu0 %v1747
      %v2330 = vpop.f32.mrf.mxu0
      %v2331 = vadd.f32 %v2318, %v2330
      %v2332 = vpop.f32.mrf.mxu0
      %2333 = vdwg.mxu0
      %2334 = vmatpush.bf16.msra.mxu0 %v2132
      %2335 = vmatpush.bf16.msra.mxu0 %v2130
      %2336 = vmatpush.bf16.msra.mxu0 %v2128
      %2337 = vmatpush.bf16.msra.mxu0 %v2126
      %2338 = vmatpush.bf16.msra.mxu0 %v2124
      %2339 = vmatpush.bf16.msra.mxu0 %v2122
      %2340 = vmatpush.bf16.msra.mxu0 %v2120
      %2341 = vmatpush.bf16.msra.mxu0 %v2118
      %2342 = vmatmul.bf16.gmra.mxu0 %v1748
      %v2343 = vpop.f32.mrf.mxu0
      %v2344 = vadd.f32 %v2331, %v2343
      %v2345 = vpop.f32.mrf.mxu0
      %2346 = vdwg.mxu0
      %v2347 = vadd.f32 %v1119, %v2240
      %v2348 = vadd.f32 %v1120, %v2344
      %v2349 = vadd.f32 %v2347, %v2348
      %2350 = vadd.xlane.f32.xlu0 %v2349
      %v2351 = vpop.xlane.xlu0 %2350
      %v2352 = vmul.f32 %v2351, 0.00390625
      %v2353 = vsub.f32 %v2347, %v2352
      %v2354 = vsub.f32 %v2348, %v2352
      %v2355 = vmul.f32 %v2353, %v2353
      %v2356 = vmul.f32 %v2354, %v2354
      %v2357 = vadd.f32 %v2355, %v2356
      %2358 = vadd.xlane.f32.xlu0 %v2357
      %v2359 = vpop.xlane.xlu0 %2358
      %v2360 = vmul.f32 %v2359, 0.00390625
      %v2361 = vadd.f32 %v2360, 1e-05
      %v2362 = vrsqrt.pop %v2361
      %v2363 = vmul.f32 %v2362, %v2361
      %v2364 = vmul.f32 %v2363, %v2362
      %v2365 = vmul.f32 0.5, %v2364
      %v2366 = vsub.f32 1.5, %v2365
      %v2367 = vmul.f32 %v2362, %v2366
      %vm2368 = vweird.f32 %v2361
      %vm2369 = vweird.f32 %v2362
      %vm2370 = vmor %vm2368, %vm2369
      %v2371 = vsel %vm2370, %v2362, %v2367
      %v2372 = vmul.f32 %v2353, %v2371
      %v2373 = vmul.f32 %v2354, %v2371
      %v2374 = vld [vmem:[%s740] sm:$0x3]
      %v2376 = vperm.slane %v2374, 0
      %v2377 = vperm.slane %v2374, 1
      %v2380 = vmul.f32 %v2372, %v2376
      %v2381 = vmul.f32 %v2373, %v2377
      %v2382 = vld [vmem:[%s744] sm:$0x3]
      %v2384 = vperm.slane %v2382, 0
      %v2385 = vperm.slane %v2382, 1
      %v2388 = vadd.f32 %v2380, %v2384
      %v2389 = vadd.f32 %v2381, %v2385
      %2390 = vst [vmem:[%s753] sm:$0xff] %v2388
      %2391 = vst [vmem:[%s753 + $0x8] sm:$0xff] %v2389
      %p2392 = scmp.lt.s32.totalorder %s29, 1
      %s2393 = scalar_select %p2392, %s29, 1
      %p2394 = scmp.lt.s32.totalorder %s30, 0
      %s2395 = scalar_select %p2394, %s30, 0
      %s2396 = smul.addr %s2395, 2
      %s2397 = smul.addr %s2393, 2
      %s2398 = sadd.s32 %s2396, %s2397
      %s2399 = smul.addr %s2398, 8
      %s2400 = scalar_lea.vmem %s14, %s2399
      // Predicated region
      $region77: #{bridge_tower_block.1} parent=75 // pred_check
        %p2401 = pneg %p425
      $region78: #{bridge_tower_block.1} parent=75 // pred_check_branch
        %2403 = sbr.rel (%p2401) target = $region80
      $region79: #{bridge_tower_block.1} parent=75 // pred_region
        _
      $region80: #{bridge_tower_block.1} parent=75 // pred_fallthru
        _
    $region76: #{bridge_tower_block.1} parent=5 // pred_fallthru
      _
    %p2404 = scmp.le.s32.totalorder 2, %s20
    // Predicated region
    $region81: #{bridge_tower_block.1} parent=5 // pred_check
      %p2405 = pneg %p2404
    $region82: #{bridge_tower_block.1} parent=5 // pred_check_branch
      %2407 = sbr.rel (%p2405) target = $region84
    $region83: #{bridge_tower_block.1} parent=5 // pred_region
      %s2408 = ssub.s32 %s20, 2
      // Predicated region
      $region85: #{bridge_tower_block.1} parent=83 // pred_check
        %p2409 = pneg %p431
      $region86: #{bridge_tower_block.1} parent=83 // pred_check_branch
        %2411 = sbr.rel (%p2409) target = $region88
      $region87: #{bridge_tower_block.1} parent=83 // pred_region
        %p2412 = scmp.lt.s32.totalorder %s31, 1
        %s2413 = scalar_select %p2412, %s31, 1
        %p2414 = scmp.lt.s32.totalorder %s32, 0
        %s2415 = scalar_select %p2414, %s32, 0
        %s2416 = smul.addr %s2415, 2
        %s2417 = smul.addr %s2413, 2
        %s2418 = sadd.s32 %s2416, %s2417
        %s2419 = smul.addr %s2418, 8
        %s2420 = scalar_lea.vmem %s14, %s2419
      $region88: #{bridge_tower_block.1} parent=83 // pred_fallthru
        _
    $region84: #{bridge_tower_block.1} parent=5 // pred_fallthru
      _
  $region6: #{bridge_tower_block.1} parent=0 // loop_footer
    %s24 = sadd.s32 1, %s20
  $region7: #{bridge_tower_block.1} parent=0 // loop_footer_branch
    %19 = sbr.rel target = $region3
  $region8: #{bridge_tower_block.1} parent=0 // loop_exit
    _

</llo_original>
